<compile_context>
chip_gen: v7x
topology: tpu7x:2x2x1
jax: 0.10.0
libtpu: 0.0.40
codegen_flags: <defaults>
</compile_context>

<pallas_src>
import functools

import numpy as np
import jax
import jax.numpy as jnp
from jax import lax
from jax.experimental import pallas as pl
from jax.experimental.pallas import tpu as pltpu


# ----------------------------------------------------------------------------
# Pallas kernel: upsample + pads + conv1(2x2) + concat + conv3x3/ReLU x2,
# all on lane-dense (C, Hu*Wu) canvases, each conv a single MXU matmul.
# ----------------------------------------------------------------------------
def _up_kernel(x1_ref, x2_ref, up_ref, place_ref, w1_ref, b1_ref,
               w2a_ref, b2a_ref, w2b_ref, b2b_ref, o_ref, *, hu, wu):
    f32 = jnp.float32

    def shifted(x, di, dj, col):
        # x : (C, hu*wu) canvas.   out[c, r*wu + q] = x[c, (r+di)*wu + (q+dj)]
        # when (r+di, q+dj) lies inside the hu x wu canvas, else 0.
        s = di * wu + dj
        if s:
            x = jnp.concatenate(
                [x[:, s:], jnp.zeros((x.shape[0], s), x.dtype)], axis=1)
        if dj:
            x = jnp.where(col < wu - dj, x, 0.0)
        return x

    def conv(x, w_ref, b_ref, k):
        # k x k conv on the canvas (out-of-canvas taps read 0):
        # im2col along sublanes, then one MXU matmul + bias.
        col = lax.broadcasted_iota(jnp.int32, x.shape, 1) % wu
        taps = [shifted(x, di, dj, col) for di in range(k) for dj in range(k)]
        patches = jnp.concatenate(taps, axis=0)              # (k*k*Cin, hu*wu)
        return jnp.dot(w_ref[...], patches,
                       preferred_element_type=f32) + b_ref[...]

    # Bilinear upsample (align_corners=True): one matmul with kron(Mh, Mw)^T.
    x1u = jnp.dot(x1_ref[0].astype(f32), up_ref[...],
                  preferred_element_type=f32)                # (2C, hu*wu)

    # conv1 (2x2) over the ZeroPad2d((0,1,0,1)) upsample; the pad is exactly the
    # zero-fill / column masking done inside shifted().
    y1 = conv(x1u, w1_ref, b1_ref, 2)                        # (C, hu*wu)

    # ZeroPad2d centring of x2 onto the canvas, expressed as a placement matmul.
    x2p = jnp.dot(x2_ref[0].astype(f32), place_ref[...],
                  preferred_element_type=f32)                # (C, hu*wu)

    cat = jnp.concatenate([x2p, y1], axis=0)                 # (2C, hu*wu)
    y2 = jnp.maximum(conv(cat, w2a_ref, b2a_ref, 3), 0.0)    # (C, hu*wu)
    y3 = jnp.maximum(conv(y2, w2b_ref, b2b_ref, 3), 0.0)     # (C, hu*wu)
    o_ref[0] = y3.astype(o_ref.dtype)


# ----------------------------------------------------------------------------
# Trace-time constants (numpy): interpolation and placement matrices
# ----------------------------------------------------------------------------
def _interp_matrix(n_in, n_out):
    """align_corners=True linear interpolation matrix, shape (n_out, n_in)."""
    m = np.zeros((n_out, n_in), np.float32)
    if n_in == 1 or n_out == 1:
        m[:, 0] = 1.0
        return m
    scale = (n_in - 1) / (n_out - 1)
    for i in range(n_out):
        pos = i * scale
        i0 = min(int(np.floor(pos)), n_in - 1)
        i1 = min(i0 + 1, n_in - 1)
        f = pos - i0
        m[i, i0] += 1.0 - f
        m[i, i1] += f
    return m


def init_up_params(key, in_dim):
    """Deterministic params, PyTorch Conv2d shapes: (out, in, kh, kw)."""
    c2 = 2 * in_dim
    ks = jax.random.split(key, 6)

    def u(k, shape, fan_in):
        b = 1.0 / np.sqrt(fan_in)
        return jax.random.uniform(k, shape, jnp.float32, -b, b)

    return {
        "w1":  u(ks[0], (in_dim, c2, 2, 2), c2 * 2 * 2),
        "b1":  u(ks[1], (in_dim,),          c2 * 2 * 2),
        "w2a": u(ks[2], (in_dim, c2, 3, 3), c2 * 3 * 3),
        "b2a": u(ks[3], (in_dim,),          c2 * 3 * 3),
        "w2b": u(ks[4], (in_dim, in_dim, 3, 3), in_dim * 3 * 3),
        "b2b": u(ks[5], (in_dim,),              in_dim * 3 * 3),
    }


# ----------------------------------------------------------------------------
# Wrapper
# ----------------------------------------------------------------------------
def up_forward(x1, x2, params):
    n, c_in, h1, w1 = x1.shape          # c_in = 2 * in_dim
    c_out = c_in // 2
    n2, cx2, h2, w2 = x2.shape
    assert n2 == n and cx2 == c_out
    hu, wu = 2 * h1, 2 * w1             # conv1 output / canvas size
    ho, wo = hu - 4, wu - 4             # final output spatial
    assert (hu - h2) % 2 == 0 and (wu - w2) % 2 == 0, "crop pad must be symmetric"
    ph, pw = (hu - h2) // 2, (wu - w2) // 2

    # Upsample matrix: x1u_canvas = x1_canvas @ kron(Mh, Mw)^T
    mh = _interp_matrix(h1, hu)                       # (hu, h1)
    mw = _interp_matrix(w1, wu)                       # (wu, w1)
    up_t = jnp.asarray(np.kron(mh, mw).T)             # (h1*w1, hu*wu)

    # Placement matrix for the x2 ZeroPad2d: x2p_canvas = x2_canvas @ P^T
    ph_m = np.eye(hu, h2, -ph, dtype=np.float32)      # (hu, h2)
    pw_m = np.eye(wu, w2, -pw, dtype=np.float32)      # (wu, w2)
    place_t = jnp.asarray(np.kron(ph_m, pw_m).T)      # (h2*w2, hu*wu)

    # Weight matrices (C_out, k*k*C_in), K ordered (tap, in-channel); biases (C_out, 1)
    w1m  = jnp.transpose(params["w1"],  (0, 2, 3, 1)).reshape(c_out, 4 * c_in)
    w2am = jnp.transpose(params["w2a"], (0, 2, 3, 1)).reshape(c_out, 9 * c_in)
    w2bm = jnp.transpose(params["w2b"], (0, 2, 3, 1)).reshape(c_out, 9 * c_out)
    b1   = params["b1"].reshape(c_out, 1)
    b2a  = params["b2a"].reshape(c_out, 1)
    b2b  = params["b2b"].reshape(c_out, 1)

    # Lane-dense canvas inputs
    x1c = x1.reshape(n, c_in, h1 * w1)
    x2c = x2.reshape(n, c_out, h2 * w2)

    kernel = functools.partial(_up_kernel, hu=hu, wu=wu)
    const = lambda b: (0, 0)

    out = pl.pallas_call(
        kernel,
        out_shape=jax.ShapeDtypeStruct((n, c_out, hu * wu), x1.dtype),
        grid=(n,),
        in_specs=[
            pl.BlockSpec((1, c_in, h1 * w1), lambda b: (b, 0, 0)),
            pl.BlockSpec((1, c_out, h2 * w2), lambda b: (b, 0, 0)),
            pl.BlockSpec((h1 * w1, hu * wu), const),   # upsample matrix
            pl.BlockSpec((h2 * w2, hu * wu), const),   # x2 placement matrix
            pl.BlockSpec((c_out, 4 * c_in), const),    # conv1 weights
            pl.BlockSpec((c_out, 1), const),           # conv1 bias
            pl.BlockSpec((c_out, 9 * c_in), const),    # conv2a weights
            pl.BlockSpec((c_out, 1), const),           # conv2a bias
            pl.BlockSpec((c_out, 9 * c_out), const),   # conv2b weights
            pl.BlockSpec((c_out, 1), const),           # conv2b bias
        ],
        out_specs=pl.BlockSpec((1, c_out, hu * wu), lambda b: (b, 0, 0)),
        compiler_params=pltpu.CompilerParams(
            dimension_semantics=("parallel",)),
    )(x1c, x2c, up_t, place_t, w1m, b1, w2am, b2a, w2bm, b2b)

    # Crop the 2H x 2W canvas back to the valid (2H-4, 2W-4) output.
    return out.reshape(n, c_out, hu, wu)[:, :, :ho, :wo]


# ----------------------------------------------------------------------------
# Pure-JAX reference (XLA convs) for a correctness check
# ----------------------------------------------------------------------------
def _ref_forward(x1, x2, params):
    n, c2, h1, w1 = x1.shape
    hu, wu = 2 * h1, 2 * w1
    mh = _interp_matrix(h1, hu)
    mw = _interp_matrix(w1, wu)
    x1u = jnp.einsum("oh,nchw,pw->ncop", mh, x1, mw)
    x1p = jnp.pad(x1u, ((0, 0), (0, 0), (0, 1), (0, 1)))
    dn = ("NCHW", "OIHW", "NCHW")
    y1 = lax.conv_general_dilated(x1p, params["w1"], (1, 1), "VALID",
                                  dimension_numbers=dn)
    y1 = y1 + params["b1"][None, :, None, None]
    ph = (y1.shape[2] - x2.shape[2]) // 2
    pw = (y1.shape[3] - x2.shape[3]) // 2
    x2p = jnp.pad(x2, ((0, 0), (0, 0), (ph, ph), (pw, pw)))
    xc = jnp.concatenate([x2p, y1], axis=1)
    y2 = lax.conv_general_dilated(xc, params["w2a"], (1, 1), "VALID",
                                  dimension_numbers=dn)
    y2 = jnp.maximum(y2 + params["b2a"][None, :, None, None], 0.0)
    y3 = lax.conv_general_dilated(y2, params["w2b"], (1, 1), "VALID",
                                  dimension_numbers=dn)
    y3 = jnp.maximum(y3 + params["b2b"][None, :, None, None], 0.0)
    return y3


if __name__ == "__main__":
    key = jax.random.PRNGKey(0)
    kx1, kx2, kp = jax.random.split(key, 3)

    in_dim = 4
    # x1 has 2*in_dim channels (fed to conv1), x2 has in_dim channels.
    x1 = jax.random.normal(kx1, (2, 2 * in_dim, 8, 8), jnp.float32)
    x2 = jax.random.normal(kx2, (2, in_dim, 12, 12), jnp.float32)
    params = init_up_params(kp, in_dim)

    out = jax.block_until_ready(up_forward(x1, x2, params))
    assert out.shape == (2, in_dim, 12, 12), out.shape

    ref = jax.block_until_ready(_ref_forward(x1, x2, params))
    # Tolerance accommodates possible reduced-precision MXU passes for f32 dots on
    # some TPU generations; structural bugs would produce O(1) mismatches.
    np.testing.assert_allclose(np.asarray(out), np.asarray(ref),
                               atol=5e-2, rtol=5e-2)
    print("KERNEL_OK")
</pallas_src>

<mosaic_0001>
module attributes {stable_mosaic.version = 11 : i64} {
  func.func @_up_kernel(%arg0: i32, %arg1: memref<1x8x64xf32, #tpu.memory_space<vmem>>, %arg2: memref<1x4x144xf32, #tpu.memory_space<vmem>>, %arg3: memref<64x256xf32, #tpu.memory_space<vmem>>, %arg4: memref<144x256xf32, #tpu.memory_space<vmem>>, %arg5: memref<4x32xf32, #tpu.memory_space<vmem>>, %arg6: memref<4x1xf32, #tpu.memory_space<vmem>>, %arg7: memref<4x72xf32, #tpu.memory_space<vmem>>, %arg8: memref<4x1xf32, #tpu.memory_space<vmem>>, %arg9: memref<4x36xf32, #tpu.memory_space<vmem>>, %arg10: memref<4x1xf32, #tpu.memory_space<vmem>>, %arg11: memref<1x4x256xf32, #tpu.memory_space<vmem>>) attributes {dimension_semantics = [#tpu.dimension_semantics<parallel>], iteration_bounds = array<i64: 2>, scalar_prefetch = 0 : i64, scratch_operands = 0 : i64, tpu.core_type = #tpu.core_type<tc>, window_params = [{transform_indices = @transform_0, window_bounds = array<i64: 1, 8, 64>}, {transform_indices = @transform_1, window_bounds = array<i64: 1, 4, 144>}, {pipeline_mode = #tpu.pipeline_mode<synchronous>, transform_indices = @transform_2, window_bounds = array<i64: 64, 256>}, {pipeline_mode = #tpu.pipeline_mode<synchronous>, transform_indices = @transform_3, window_bounds = array<i64: 144, 256>}, {pipeline_mode = #tpu.pipeline_mode<synchronous>, transform_indices = @transform_4, window_bounds = array<i64: 4, 32>}, {pipeline_mode = #tpu.pipeline_mode<synchronous>, transform_indices = @transform_5, window_bounds = array<i64: 4, 1>}, {pipeline_mode = #tpu.pipeline_mode<synchronous>, transform_indices = @transform_6, window_bounds = array<i64: 4, 72>}, {pipeline_mode = #tpu.pipeline_mode<synchronous>, transform_indices = @transform_7, window_bounds = array<i64: 4, 1>}, {pipeline_mode = #tpu.pipeline_mode<synchronous>, transform_indices = @transform_8, window_bounds = array<i64: 4, 36>}, {pipeline_mode = #tpu.pipeline_mode<synchronous>, transform_indices = @transform_9, window_bounds = array<i64: 4, 1>}, {transform_indices = @transform_10, window_bounds = array<i64: 1, 4, 256>}]} {
    %c0 = arith.constant 0 : index
    %c0_0 = arith.constant 0 : index
    %c0_1 = arith.constant 0 : index
    %0 = vector.load %arg1[%c0, %c0_0, %c0_1] : memref<1x8x64xf32, #tpu.memory_space<vmem>>, vector<1x8x64xf32>
    %1 = vector.shape_cast %0 : vector<1x8x64xf32> to vector<8x64xf32>
    %c0_2 = arith.constant 0 : index
    %c0_3 = arith.constant 0 : index
    %2 = vector.load %arg3[%c0_2, %c0_3] : memref<64x256xf32, #tpu.memory_space<vmem>>, vector<64x256xf32>
    %cst = arith.constant dense<0.000000e+00> : vector<8x256xf32>
    %3 = tpu.matmul %1, %2, %cst {dimension_numbers = #tpu.dot_dimension_numbers<[1], [0], [0], [1], [0, 0, 1, 1], [], []>} : vector<8x64xf32>, vector<64x256xf32>, vector<8x256xf32> -> vector<8x256xf32>
    %4 = tpu.iota {dimensions = array<i32: 1>} : vector<8x256xi32>
    %c16_i32 = arith.constant 16 : i32
    %c0_i32 = arith.constant 0 : i32
    %5 = arith.cmpi eq, %c16_i32, %c0_i32 : i32
    %c1_i32 = arith.constant 1 : i32
    %6 = arith.select %5, %c1_i32, %c16_i32 : i32
    %7 = vector.broadcast %6 : i32 to vector<8x256xi32>
    %8 = arith.remsi %4, %7 : vector<8x256xi32>
    %c0_i32_4 = arith.constant 0 : i32
    %9 = vector.broadcast %c0_i32_4 : i32 to vector<8x256xi32>
    %10 = arith.cmpi ne, %8, %9 : vector<8x256xi32>
    %c0_i32_5 = arith.constant 0 : i32
    %11 = vector.broadcast %c0_i32_5 : i32 to vector<8x256xi32>
    %12 = arith.cmpi slt, %8, %11 : vector<8x256xi32>
    %c0_i32_6 = arith.constant 0 : i32
    %13 = arith.cmpi slt, %6, %c0_i32_6 : i32
    %14 = vector.broadcast %13 : i1 to vector<8x256xi1>
    %15 = vector.broadcast %14 : vector<8x256xi1> to vector<8x256xi1>
    %16 = arith.xori %12, %15 : vector<8x256xi1>
    %17 = arith.andi %16, %10 : vector<8x256xi1>
    %18 = vector.broadcast %6 : i32 to vector<8x256xi32>
    %19 = arith.addi %8, %18 : vector<8x256xi32>
    %20 = arith.select %17, %19, %8 : vector<8x256xi1>, vector<8x256xi32>
    %21 = vector.extract_strided_slice %3 {offsets = [0, 1], sizes = [8, 255], strides = [1, 1]} : vector<8x256xf32> to vector<8x255xf32>
    %cst_7 = arith.constant 0.000000e+00 : f32
    %22 = vector.broadcast %cst_7 : f32 to vector<8x1xf32>
    %23 = tpu.concatenate %21, %22 in 1 : vector<8x255xf32>, vector<8x1xf32> -> vector<8x256xf32>
    %c15_i32 = arith.constant 15 : i32
    %24 = vector.broadcast %c15_i32 : i32 to vector<8x256xi32>
    %25 = arith.cmpi slt, %20, %24 : vector<8x256xi32>
    %cst_8 = arith.constant 0.000000e+00 : f32
    %26 = vector.broadcast %cst_8 : f32 to vector<8x256xf32>
    %27 = arith.select %25, %23, %26 : vector<8x256xi1>, vector<8x256xf32>
    %28 = vector.extract_strided_slice %3 {offsets = [0, 16], sizes = [8, 240], strides = [1, 1]} : vector<8x256xf32> to vector<8x240xf32>
    %cst_9 = arith.constant 0.000000e+00 : f32
    %29 = vector.broadcast %cst_9 : f32 to vector<8x16xf32>
    %30 = tpu.concatenate %28, %29 in 1 : vector<8x240xf32>, vector<8x16xf32> -> vector<8x256xf32>
    %31 = vector.extract_strided_slice %3 {offsets = [0, 17], sizes = [8, 239], strides = [1, 1]} : vector<8x256xf32> to vector<8x239xf32>
    %cst_10 = arith.constant 0.000000e+00 : f32
    %32 = vector.broadcast %cst_10 : f32 to vector<8x17xf32>
    %33 = tpu.concatenate %31, %32 in 1 : vector<8x239xf32>, vector<8x17xf32> -> vector<8x256xf32>
    %c15_i32_11 = arith.constant 15 : i32
    %34 = vector.broadcast %c15_i32_11 : i32 to vector<8x256xi32>
    %35 = arith.cmpi slt, %20, %34 : vector<8x256xi32>
    %cst_12 = arith.constant 0.000000e+00 : f32
    %36 = vector.broadcast %cst_12 : f32 to vector<8x256xf32>
    %37 = arith.select %35, %33, %36 : vector<8x256xi1>, vector<8x256xf32>
    %38 = tpu.concatenate %3, %27, %30, %37 in 0 : vector<8x256xf32>, vector<8x256xf32>, vector<8x256xf32>, vector<8x256xf32> -> vector<32x256xf32>
    %c0_13 = arith.constant 0 : index
    %c0_14 = arith.constant 0 : index
    %39 = vector.load %arg5[%c0_13, %c0_14] : memref<4x32xf32, #tpu.memory_space<vmem>>, vector<4x32xf32>
    %cst_15 = arith.constant dense<0.000000e+00> : vector<4x256xf32>
    %40 = tpu.matmul %39, %38, %cst_15 {dimension_numbers = #tpu.dot_dimension_numbers<[1], [0], [0], [1], [0, 0, 1, 1], [], []>} : vector<4x32xf32>, vector<32x256xf32>, vector<4x256xf32> -> vector<4x256xf32>
    %c0_16 = arith.constant 0 : index
    %c0_17 = arith.constant 0 : index
    %41 = vector.load %arg6[%c0_16, %c0_17] : memref<4x1xf32, #tpu.memory_space<vmem>>, vector<4x1xf32>
    %42 = vector.broadcast %41 : vector<4x1xf32> to vector<4x256xf32>
    %43 = arith.addf %40, %42 : vector<4x256xf32>
    %c0_18 = arith.constant 0 : index
    %c0_19 = arith.constant 0 : index
    %c0_20 = arith.constant 0 : index
    %44 = vector.load %arg2[%c0_18, %c0_19, %c0_20] : memref<1x4x144xf32, #tpu.memory_space<vmem>>, vector<1x4x144xf32>
    %45 = vector.shape_cast %44 : vector<1x4x144xf32> to vector<4x144xf32>
    %c0_21 = arith.constant 0 : index
    %c0_22 = arith.constant 0 : index
    %46 = vector.load %arg4[%c0_21, %c0_22] : memref<144x256xf32, #tpu.memory_space<vmem>>, vector<144x256xf32>
    %cst_23 = arith.constant dense<0.000000e+00> : vector<4x256xf32>
    %47 = tpu.matmul %45, %46, %cst_23 {dimension_numbers = #tpu.dot_dimension_numbers<[1], [0], [0], [1], [0, 0, 1, 1], [], []>} : vector<4x144xf32>, vector<144x256xf32>, vector<4x256xf32> -> vector<4x256xf32>
    %48 = tpu.concatenate %47, %43 in 0 : vector<4x256xf32>, vector<4x256xf32> -> vector<8x256xf32>
    %49 = tpu.iota {dimensions = array<i32: 1>} : vector<8x256xi32>
    %c16_i32_24 = arith.constant 16 : i32
    %c0_i32_25 = arith.constant 0 : i32
    %50 = arith.cmpi eq, %c16_i32_24, %c0_i32_25 : i32
    %c1_i32_26 = arith.constant 1 : i32
    %51 = arith.select %50, %c1_i32_26, %c16_i32_24 : i32
    %52 = vector.broadcast %51 : i32 to vector<8x256xi32>
    %53 = arith.remsi %49, %52 : vector<8x256xi32>
    %c0_i32_27 = arith.constant 0 : i32
    %54 = vector.broadcast %c0_i32_27 : i32 to vector<8x256xi32>
    %55 = arith.cmpi ne, %53, %54 : vector<8x256xi32>
    %c0_i32_28 = arith.constant 0 : i32
    %56 = vector.broadcast %c0_i32_28 : i32 to vector<8x256xi32>
    %57 = arith.cmpi slt, %53, %56 : vector<8x256xi32>
    %c0_i32_29 = arith.constant 0 : i32
    %58 = arith.cmpi slt, %51, %c0_i32_29 : i32
    %59 = vector.broadcast %58 : i1 to vector<8x256xi1>
    %60 = vector.broadcast %59 : vector<8x256xi1> to vector<8x256xi1>
    %61 = arith.xori %57, %60 : vector<8x256xi1>
    %62 = arith.andi %61, %55 : vector<8x256xi1>
    %63 = vector.broadcast %51 : i32 to vector<8x256xi32>
    %64 = arith.addi %53, %63 : vector<8x256xi32>
    %65 = arith.select %62, %64, %53 : vector<8x256xi1>, vector<8x256xi32>
    %66 = vector.extract_strided_slice %48 {offsets = [0, 1], sizes = [8, 255], strides = [1, 1]} : vector<8x256xf32> to vector<8x255xf32>
    %cst_30 = arith.constant 0.000000e+00 : f32
    %67 = vector.broadcast %cst_30 : f32 to vector<8x1xf32>
    %68 = tpu.concatenate %66, %67 in 1 : vector<8x255xf32>, vector<8x1xf32> -> vector<8x256xf32>
    %c15_i32_31 = arith.constant 15 : i32
    %69 = vector.broadcast %c15_i32_31 : i32 to vector<8x256xi32>
    %70 = arith.cmpi slt, %65, %69 : vector<8x256xi32>
    %cst_32 = arith.constant 0.000000e+00 : f32
    %71 = vector.broadcast %cst_32 : f32 to vector<8x256xf32>
    %72 = arith.select %70, %68, %71 : vector<8x256xi1>, vector<8x256xf32>
    %73 = vector.extract_strided_slice %48 {offsets = [0, 2], sizes = [8, 254], strides = [1, 1]} : vector<8x256xf32> to vector<8x254xf32>
    %cst_33 = arith.constant 0.000000e+00 : f32
    %74 = vector.broadcast %cst_33 : f32 to vector<8x2xf32>
    %75 = tpu.concatenate %73, %74 in 1 : vector<8x254xf32>, vector<8x2xf32> -> vector<8x256xf32>
    %c14_i32 = arith.constant 14 : i32
    %76 = vector.broadcast %c14_i32 : i32 to vector<8x256xi32>
    %77 = arith.cmpi slt, %65, %76 : vector<8x256xi32>
    %cst_34 = arith.constant 0.000000e+00 : f32
    %78 = vector.broadcast %cst_34 : f32 to vector<8x256xf32>
    %79 = arith.select %77, %75, %78 : vector<8x256xi1>, vector<8x256xf32>
    %80 = vector.extract_strided_slice %48 {offsets = [0, 16], sizes = [8, 240], strides = [1, 1]} : vector<8x256xf32> to vector<8x240xf32>
    %cst_35 = arith.constant 0.000000e+00 : f32
    %81 = vector.broadcast %cst_35 : f32 to vector<8x16xf32>
    %82 = tpu.concatenate %80, %81 in 1 : vector<8x240xf32>, vector<8x16xf32> -> vector<8x256xf32>
    %83 = vector.extract_strided_slice %48 {offsets = [0, 17], sizes = [8, 239], strides = [1, 1]} : vector<8x256xf32> to vector<8x239xf32>
    %cst_36 = arith.constant 0.000000e+00 : f32
    %84 = vector.broadcast %cst_36 : f32 to vector<8x17xf32>
    %85 = tpu.concatenate %83, %84 in 1 : vector<8x239xf32>, vector<8x17xf32> -> vector<8x256xf32>
    %c15_i32_37 = arith.constant 15 : i32
    %86 = vector.broadcast %c15_i32_37 : i32 to vector<8x256xi32>
    %87 = arith.cmpi slt, %65, %86 : vector<8x256xi32>
    %cst_38 = arith.constant 0.000000e+00 : f32
    %88 = vector.broadcast %cst_38 : f32 to vector<8x256xf32>
    %89 = arith.select %87, %85, %88 : vector<8x256xi1>, vector<8x256xf32>
    %90 = vector.extract_strided_slice %48 {offsets = [0, 18], sizes = [8, 238], strides = [1, 1]} : vector<8x256xf32> to vector<8x238xf32>
    %cst_39 = arith.constant 0.000000e+00 : f32
    %91 = vector.broadcast %cst_39 : f32 to vector<8x18xf32>
    %92 = tpu.concatenate %90, %91 in 1 : vector<8x238xf32>, vector<8x18xf32> -> vector<8x256xf32>
    %c14_i32_40 = arith.constant 14 : i32
    %93 = vector.broadcast %c14_i32_40 : i32 to vector<8x256xi32>
    %94 = arith.cmpi slt, %65, %93 : vector<8x256xi32>
    %cst_41 = arith.constant 0.000000e+00 : f32
    %95 = vector.broadcast %cst_41 : f32 to vector<8x256xf32>
    %96 = arith.select %94, %92, %95 : vector<8x256xi1>, vector<8x256xf32>
    %97 = vector.extract_strided_slice %48 {offsets = [0, 32], sizes = [8, 224], strides = [1, 1]} : vector<8x256xf32> to vector<8x224xf32>
    %cst_42 = arith.constant 0.000000e+00 : f32
    %98 = vector.broadcast %cst_42 : f32 to vector<8x32xf32>
    %99 = tpu.concatenate %97, %98 in 1 : vector<8x224xf32>, vector<8x32xf32> -> vector<8x256xf32>
    %100 = vector.extract_strided_slice %48 {offsets = [0, 33], sizes = [8, 223], strides = [1, 1]} : vector<8x256xf32> to vector<8x223xf32>
    %cst_43 = arith.constant 0.000000e+00 : f32
    %101 = vector.broadcast %cst_43 : f32 to vector<8x33xf32>
    %102 = tpu.concatenate %100, %101 in 1 : vector<8x223xf32>, vector<8x33xf32> -> vector<8x256xf32>
    %c15_i32_44 = arith.constant 15 : i32
    %103 = vector.broadcast %c15_i32_44 : i32 to vector<8x256xi32>
    %104 = arith.cmpi slt, %65, %103 : vector<8x256xi32>
    %cst_45 = arith.constant 0.000000e+00 : f32
    %105 = vector.broadcast %cst_45 : f32 to vector<8x256xf32>
    %106 = arith.select %104, %102, %105 : vector<8x256xi1>, vector<8x256xf32>
    %107 = vector.extract_strided_slice %48 {offsets = [0, 34], sizes = [8, 222], strides = [1, 1]} : vector<8x256xf32> to vector<8x222xf32>
    %cst_46 = arith.constant 0.000000e+00 : f32
    %108 = vector.broadcast %cst_46 : f32 to vector<8x34xf32>
    %109 = tpu.concatenate %107, %108 in 1 : vector<8x222xf32>, vector<8x34xf32> -> vector<8x256xf32>
    %c14_i32_47 = arith.constant 14 : i32
    %110 = vector.broadcast %c14_i32_47 : i32 to vector<8x256xi32>
    %111 = arith.cmpi slt, %65, %110 : vector<8x256xi32>
    %cst_48 = arith.constant 0.000000e+00 : f32
    %112 = vector.broadcast %cst_48 : f32 to vector<8x256xf32>
    %113 = arith.select %111, %109, %112 : vector<8x256xi1>, vector<8x256xf32>
    %114 = tpu.concatenate %48, %72, %79, %82, %89, %96, %99, %106, %113 in 0 : vector<8x256xf32>, vector<8x256xf32>, vector<8x256xf32>, vector<8x256xf32>, vector<8x256xf32>, vector<8x256xf32>, vector<8x256xf32>, vector<8x256xf32>, vector<8x256xf32> -> vector<72x256xf32>
    %c0_49 = arith.constant 0 : index
    %c0_50 = arith.constant 0 : index
    %115 = vector.load %arg7[%c0_49, %c0_50] : memref<4x72xf32, #tpu.memory_space<vmem>>, vector<4x72xf32>
    %cst_51 = arith.constant dense<0.000000e+00> : vector<4x256xf32>
    %116 = tpu.matmul %115, %114, %cst_51 {dimension_numbers = #tpu.dot_dimension_numbers<[1], [0], [0], [1], [0, 0, 1, 1], [], []>} : vector<4x72xf32>, vector<72x256xf32>, vector<4x256xf32> -> vector<4x256xf32>
    %c0_52 = arith.constant 0 : index
    %c0_53 = arith.constant 0 : index
    %117 = vector.load %arg8[%c0_52, %c0_53] : memref<4x1xf32, #tpu.memory_space<vmem>>, vector<4x1xf32>
    %118 = vector.broadcast %117 : vector<4x1xf32> to vector<4x256xf32>
    %119 = arith.addf %116, %118 : vector<4x256xf32>
    %cst_54 = arith.constant 0.000000e+00 : f32
    %120 = vector.broadcast %cst_54 : f32 to vector<4x256xf32>
    %121 = arith.maximumf %119, %120 : vector<4x256xf32>
    %122 = tpu.iota {dimensions = array<i32: 1>} : vector<4x256xi32>
    %c16_i32_55 = arith.constant 16 : i32
    %c0_i32_56 = arith.constant 0 : i32
    %123 = arith.cmpi eq, %c16_i32_55, %c0_i32_56 : i32
    %c1_i32_57 = arith.constant 1 : i32
    %124 = arith.select %123, %c1_i32_57, %c16_i32_55 : i32
    %125 = vector.broadcast %124 : i32 to vector<4x256xi32>
    %126 = arith.remsi %122, %125 : vector<4x256xi32>
    %c0_i32_58 = arith.constant 0 : i32
    %127 = vector.broadcast %c0_i32_58 : i32 to vector<4x256xi32>
    %128 = arith.cmpi ne, %126, %127 : vector<4x256xi32>
    %c0_i32_59 = arith.constant 0 : i32
    %129 = vector.broadcast %c0_i32_59 : i32 to vector<4x256xi32>
    %130 = arith.cmpi slt, %126, %129 : vector<4x256xi32>
    %c0_i32_60 = arith.constant 0 : i32
    %131 = arith.cmpi slt, %124, %c0_i32_60 : i32
    %132 = vector.broadcast %131 : i1 to vector<4x256xi1>
    %133 = vector.broadcast %132 : vector<4x256xi1> to vector<4x256xi1>
    %134 = arith.xori %130, %133 : vector<4x256xi1>
    %135 = arith.andi %134, %128 : vector<4x256xi1>
    %136 = vector.broadcast %124 : i32 to vector<4x256xi32>
    %137 = arith.addi %126, %136 : vector<4x256xi32>
    %138 = arith.select %135, %137, %126 : vector<4x256xi1>, vector<4x256xi32>
    %139 = vector.extract_strided_slice %121 {offsets = [0, 1], sizes = [4, 255], strides = [1, 1]} : vector<4x256xf32> to vector<4x255xf32>
    %cst_61 = arith.constant 0.000000e+00 : f32
    %140 = vector.broadcast %cst_61 : f32 to vector<4x1xf32>
    %141 = tpu.concatenate %139, %140 in 1 : vector<4x255xf32>, vector<4x1xf32> -> vector<4x256xf32>
    %c15_i32_62 = arith.constant 15 : i32
    %142 = vector.broadcast %c15_i32_62 : i32 to vector<4x256xi32>
    %143 = arith.cmpi slt, %138, %142 : vector<4x256xi32>
    %cst_63 = arith.constant 0.000000e+00 : f32
    %144 = vector.broadcast %cst_63 : f32 to vector<4x256xf32>
    %145 = arith.select %143, %141, %144 : vector<4x256xi1>, vector<4x256xf32>
    %146 = vector.extract_strided_slice %121 {offsets = [0, 2], sizes = [4, 254], strides = [1, 1]} : vector<4x256xf32> to vector<4x254xf32>
    %cst_64 = arith.constant 0.000000e+00 : f32
    %147 = vector.broadcast %cst_64 : f32 to vector<4x2xf32>
    %148 = tpu.concatenate %146, %147 in 1 : vector<4x254xf32>, vector<4x2xf32> -> vector<4x256xf32>
    %c14_i32_65 = arith.constant 14 : i32
    %149 = vector.broadcast %c14_i32_65 : i32 to vector<4x256xi32>
    %150 = arith.cmpi slt, %138, %149 : vector<4x256xi32>
    %cst_66 = arith.constant 0.000000e+00 : f32
    %151 = vector.broadcast %cst_66 : f32 to vector<4x256xf32>
    %152 = arith.select %150, %148, %151 : vector<4x256xi1>, vector<4x256xf32>
    %153 = vector.extract_strided_slice %121 {offsets = [0, 16], sizes = [4, 240], strides = [1, 1]} : vector<4x256xf32> to vector<4x240xf32>
    %cst_67 = arith.constant 0.000000e+00 : f32
    %154 = vector.broadcast %cst_67 : f32 to vector<4x16xf32>
    %155 = tpu.concatenate %153, %154 in 1 : vector<4x240xf32>, vector<4x16xf32> -> vector<4x256xf32>
    %156 = vector.extract_strided_slice %121 {offsets = [0, 17], sizes = [4, 239], strides = [1, 1]} : vector<4x256xf32> to vector<4x239xf32>
    %cst_68 = arith.constant 0.000000e+00 : f32
    %157 = vector.broadcast %cst_68 : f32 to vector<4x17xf32>
    %158 = tpu.concatenate %156, %157 in 1 : vector<4x239xf32>, vector<4x17xf32> -> vector<4x256xf32>
    %c15_i32_69 = arith.constant 15 : i32
    %159 = vector.broadcast %c15_i32_69 : i32 to vector<4x256xi32>
    %160 = arith.cmpi slt, %138, %159 : vector<4x256xi32>
    %cst_70 = arith.constant 0.000000e+00 : f32
    %161 = vector.broadcast %cst_70 : f32 to vector<4x256xf32>
    %162 = arith.select %160, %158, %161 : vector<4x256xi1>, vector<4x256xf32>
    %163 = vector.extract_strided_slice %121 {offsets = [0, 18], sizes = [4, 238], strides = [1, 1]} : vector<4x256xf32> to vector<4x238xf32>
    %cst_71 = arith.constant 0.000000e+00 : f32
    %164 = vector.broadcast %cst_71 : f32 to vector<4x18xf32>
    %165 = tpu.concatenate %163, %164 in 1 : vector<4x238xf32>, vector<4x18xf32> -> vector<4x256xf32>
    %c14_i32_72 = arith.constant 14 : i32
    %166 = vector.broadcast %c14_i32_72 : i32 to vector<4x256xi32>
    %167 = arith.cmpi slt, %138, %166 : vector<4x256xi32>
    %cst_73 = arith.constant 0.000000e+00 : f32
    %168 = vector.broadcast %cst_73 : f32 to vector<4x256xf32>
    %169 = arith.select %167, %165, %168 : vector<4x256xi1>, vector<4x256xf32>
    %170 = vector.extract_strided_slice %121 {offsets = [0, 32], sizes = [4, 224], strides = [1, 1]} : vector<4x256xf32> to vector<4x224xf32>
    %cst_74 = arith.constant 0.000000e+00 : f32
    %171 = vector.broadcast %cst_74 : f32 to vector<4x32xf32>
    %172 = tpu.concatenate %170, %171 in 1 : vector<4x224xf32>, vector<4x32xf32> -> vector<4x256xf32>
    %173 = vector.extract_strided_slice %121 {offsets = [0, 33], sizes = [4, 223], strides = [1, 1]} : vector<4x256xf32> to vector<4x223xf32>
    %cst_75 = arith.constant 0.000000e+00 : f32
    %174 = vector.broadcast %cst_75 : f32 to vector<4x33xf32>
    %175 = tpu.concatenate %173, %174 in 1 : vector<4x223xf32>, vector<4x33xf32> -> vector<4x256xf32>
    %c15_i32_76 = arith.constant 15 : i32
    %176 = vector.broadcast %c15_i32_76 : i32 to vector<4x256xi32>
    %177 = arith.cmpi slt, %138, %176 : vector<4x256xi32>
    %cst_77 = arith.constant 0.000000e+00 : f32
    %178 = vector.broadcast %cst_77 : f32 to vector<4x256xf32>
    %179 = arith.select %177, %175, %178 : vector<4x256xi1>, vector<4x256xf32>
    %180 = vector.extract_strided_slice %121 {offsets = [0, 34], sizes = [4, 222], strides = [1, 1]} : vector<4x256xf32> to vector<4x222xf32>
    %cst_78 = arith.constant 0.000000e+00 : f32
    %181 = vector.broadcast %cst_78 : f32 to vector<4x34xf32>
    %182 = tpu.concatenate %180, %181 in 1 : vector<4x222xf32>, vector<4x34xf32> -> vector<4x256xf32>
    %c14_i32_79 = arith.constant 14 : i32
    %183 = vector.broadcast %c14_i32_79 : i32 to vector<4x256xi32>
    %184 = arith.cmpi slt, %138, %183 : vector<4x256xi32>
    %cst_80 = arith.constant 0.000000e+00 : f32
    %185 = vector.broadcast %cst_80 : f32 to vector<4x256xf32>
    %186 = arith.select %184, %182, %185 : vector<4x256xi1>, vector<4x256xf32>
    %187 = tpu.concatenate %121, %145, %152, %155, %162, %169, %172, %179, %186 in 0 : vector<4x256xf32>, vector<4x256xf32>, vector<4x256xf32>, vector<4x256xf32>, vector<4x256xf32>, vector<4x256xf32>, vector<4x256xf32>, vector<4x256xf32>, vector<4x256xf32> -> vector<36x256xf32>
    %c0_81 = arith.constant 0 : index
    %c0_82 = arith.constant 0 : index
    %188 = vector.load %arg9[%c0_81, %c0_82] : memref<4x36xf32, #tpu.memory_space<vmem>>, vector<4x36xf32>
    %cst_83 = arith.constant dense<0.000000e+00> : vector<4x256xf32>
    %189 = tpu.matmul %188, %187, %cst_83 {dimension_numbers = #tpu.dot_dimension_numbers<[1], [0], [0], [1], [0, 0, 1, 1], [], []>} : vector<4x36xf32>, vector<36x256xf32>, vector<4x256xf32> -> vector<4x256xf32>
    %c0_84 = arith.constant 0 : index
    %c0_85 = arith.constant 0 : index
    %190 = vector.load %arg10[%c0_84, %c0_85] : memref<4x1xf32, #tpu.memory_space<vmem>>, vector<4x1xf32>
    %191 = vector.broadcast %190 : vector<4x1xf32> to vector<4x256xf32>
    %192 = arith.addf %189, %191 : vector<4x256xf32>
    %cst_86 = arith.constant 0.000000e+00 : f32
    %193 = vector.broadcast %cst_86 : f32 to vector<4x256xf32>
    %194 = arith.maximumf %192, %193 : vector<4x256xf32>
    %c0_87 = arith.constant 0 : index
    %c0_88 = arith.constant 0 : index
    %c0_89 = arith.constant 0 : index
    %195 = vector.load %arg11[%c0_87, %c0_88, %c0_89] : memref<1x4x256xf32, #tpu.memory_space<vmem>>, vector<1x4x256xf32>
    %196 = vector.shape_cast %195 : vector<1x4x256xf32> to vector<4x256xf32>
    %197 = vector.shape_cast %194 : vector<4x256xf32> to vector<1x4x256xf32>
    tpu.vector_store %arg11[%c0_87, %c0_88, %c0_89], %197 {strides = array<i32>} : memref<1x4x256xf32, #tpu.memory_space<vmem>>, vector<1x4x256xf32>,
    return
  }
  func.func @transform_0(%arg0: i32) -> (i32, i32, i32) {
    %c0_i32 = arith.constant 0 : i32
    %c0_i32_0 = arith.constant 0 : i32
    %c0_i32_1 = arith.constant 0 : i32
    return %arg0, %c0_i32, %c0_i32_0 : i32, i32, i32
  }
  func.func @transform_1(%arg0: i32) -> (i32, i32, i32) {
    %c0_i32 = arith.constant 0 : i32
    %c0_i32_0 = arith.constant 0 : i32
    %c0_i32_1 = arith.constant 0 : i32
    return %arg0, %c0_i32, %c0_i32_0 : i32, i32, i32
  }
  func.func @transform_2(%arg0: i32) -> (i32, i32) {
    %c0_i32 = arith.constant 0 : i32
    %c0_i32_0 = arith.constant 0 : i32
    %c0_i32_1 = arith.constant 0 : i32
    return %c0_i32, %c0_i32_0 : i32, i32
  }
  func.func @transform_3(%arg0: i32) -> (i32, i32) {
    %c0_i32 = arith.constant 0 : i32
    %c0_i32_0 = arith.constant 0 : i32
    %c0_i32_1 = arith.constant 0 : i32
    return %c0_i32, %c0_i32_0 : i32, i32
  }
  func.func @transform_4(%arg0: i32) -> (i32, i32) {
    %c0_i32 = arith.constant 0 : i32
    %c0_i32_0 = arith.constant 0 : i32
    %c0_i32_1 = arith.constant 0 : i32
    return %c0_i32, %c0_i32_0 : i32, i32
  }
  func.func @transform_5(%arg0: i32) -> (i32, i32) {
    %c0_i32 = arith.constant 0 : i32
    %c0_i32_0 = arith.constant 0 : i32
    %c0_i32_1 = arith.constant 0 : i32
    return %c0_i32, %c0_i32_0 : i32, i32
  }
  func.func @transform_6(%arg0: i32) -> (i32, i32) {
    %c0_i32 = arith.constant 0 : i32
    %c0_i32_0 = arith.constant 0 : i32
    %c0_i32_1 = arith.constant 0 : i32
    return %c0_i32, %c0_i32_0 : i32, i32
  }
  func.func @transform_7(%arg0: i32) -> (i32, i32) {
    %c0_i32 = arith.constant 0 : i32
    %c0_i32_0 = arith.constant 0 : i32
    %c0_i32_1 = arith.constant 0 : i32
    return %c0_i32, %c0_i32_0 : i32, i32
  }
  func.func @transform_8(%arg0: i32) -> (i32, i32) {
    %c0_i32 = arith.constant 0 : i32
    %c0_i32_0 = arith.constant 0 : i32
    %c0_i32_1 = arith.constant 0 : i32
    return %c0_i32, %c0_i32_0 : i32, i32
  }
  func.func @transform_9(%arg0: i32) -> (i32, i32) {
    %c0_i32 = arith.constant 0 : i32
    %c0_i32_0 = arith.constant 0 : i32
    %c0_i32_1 = arith.constant 0 : i32
    return %c0_i32, %c0_i32_0 : i32, i32
  }
  func.func @transform_10(%arg0: i32) -> (i32, i32, i32) {
    %c0_i32 = arith.constant 0 : i32
    %c0_i32_0 = arith.constant 0 : i32
    %c0_i32_1 = arith.constant 0 : i32
    return %arg0, %c0_i32, %c0_i32_0 : i32, i32, i32
  }
}

</mosaic_0001>

<llo_original>
// kernel: tpu_custom_call.1
$region0: #{tpu_custom_call.1}
  #allocation0 [shape = 'u32[]', space=smem, size = 0x4, offset = 0x4, fixed_abs, tag = 'smem constant byte address 0x4 - core index']
  #allocation1 [shape = 'u32[144,128]{1,0:T(1,128)}', space=vmem, size = 0x12000, scoped, tag = 'internal scratch']
  %s0 = inlined_call_operand.hbm [shape: f32[2,8,64], index: 0, kind: input, shape index: {}]
  %s1 = inlined_call_operand.vmem [shape: f32[2,4,144], index: 1, kind: input, shape index: {}]
  %s2 = inlined_call_operand.hbm [shape: f32[64,256], index: 2, kind: input, shape index: {}]
  %s3 = inlined_call_operand.hbm [shape: f32[144,256], index: 3, kind: input, shape index: {}]
  %s4 = inlined_call_operand.vmem [shape: f32[4,32], index: 4, kind: input, shape index: {}]
  %s5 = inlined_call_operand.vmem [shape: f32[4,1], index: 5, kind: input, shape index: {}]
  %s6 = inlined_call_operand.vmem [shape: f32[4,72], index: 6, kind: input, shape index: {}]
  %s7 = inlined_call_operand.vmem [shape: f32[4,1], index: 7, kind: input, shape index: {}]
  %s8 = inlined_call_operand.vmem [shape: f32[4,36], index: 8, kind: input, shape index: {}]
  %s9 = inlined_call_operand.vmem [shape: f32[4,1], index: 9, kind: input, shape index: {}]
  %s10 = inlined_call_operand.hbm [shape: f32[2,4,256], index: 10, kind: output, shape index: {}]
  %s11 = sld [smem:[#allocation0]]
  $region85: #{tpu_custom_call.1} parent=0
    _
  %s13 = ssub.s32 1, %s11
  %s14 = scalar_select 0, %s13, %s11
  $region1: #{tpu_custom_call.1} parent=0
    #allocation2 [shape = 'u8[8192]{0}', space=vmem, size = 0x2000, scoped, tag = 'input window, operand 0']
    #allocation3 [shape = 's32[2]{0}', space=sflag, size = 0x8, scoped, tag = 'scoped memory for tpu_custom_call.1']
    #allocation4 [shape = 's32[2]{0}', space=sflag, size = 0x8, scoped, tag = 'scoped memory for tpu_custom_call.1']
    #allocation5 [shape = 'u8[65536]{0}', space=vmem, size = 0x10000, scoped, tag = 'input window, operand 2, single buffered']
    #allocation6 [shape = 's32[1]{0}', space=sflag, size = 0x4, scoped, tag = 'scoped memory for tpu_custom_call.1']
    #allocation7 [shape = 'u8[147456]{0}', space=vmem, size = 0x24000, scoped, tag = 'input window, operand 3, single buffered']
    #allocation8 [shape = 'u8[8192]{0}', space=vmem, size = 0x2000, scoped, tag = 'output window, operand 0']
    %15 = vsyncpa [#allocation3], 0
    %s16 = scalar_lea.sflag [#allocation3], 1
    %17 = vsyncpa %s16, 0
    %18 = vsyncpa [#allocation6], 0
    %19 = vsyncpa [#allocation4], 0
    %s20 = scalar_lea.sflag [#allocation4], 1
    %21 = vsyncpa %s20, 0
    loop: start=0, step=1, limit=4
    $region2: #{tpu_custom_call.1} parent=1 // loop_pre_header
      _
    $region3: #{tpu_custom_call.1} parent=1 // loop_header
      %s23 = sphi 0, %s27
      %p24 = scmp.ge.s32.totalorder %s23, 4
      %s33 = sphi 0, %s35
      %s36 = sphi 0, %s33
      %s37 = sphi 0, %s36
      %s53 = sphi 0, %s37
      %s59 = sphi 0, %s61
      %s62 = sphi 0, %s59
      %s63 = sphi 0, %s62
      %s79 = sphi 0, %s63
      %s83 = sphi 0, %s83
      %s85 = sphi 0, %s83
      %s86 = sphi 0, %s85
      %s100 = sphi 0, %s86
      %s104 = sphi 0, %s104
      %s106 = sphi 0, %s104
      %s107 = sphi 0, %s106
      %s121 = sphi 0, %s107
      %s125 = sphi 0, %s125
      %s127 = sphi 0, %s125
      %s128 = sphi 0, %s127
      %s142 = sphi 0, %s128
      %s146 = sphi 0, %s146
      %s148 = sphi 0, %s146
      %s149 = sphi 0, %s148
      %s163 = sphi 0, %s149
      %s167 = sphi 0, %s167
      %s169 = sphi 0, %s167
      %s170 = sphi 0, %s169
      %s184 = sphi 0, %s170
      %s188 = sphi 0, %s188
      %s190 = sphi 0, %s188
      %s191 = sphi 0, %s190
      %s205 = sphi 0, %s191
      %s209 = sphi 0, %s209
      %s211 = sphi 0, %s209
      %s212 = sphi 0, %s211
      %s226 = sphi 0, %s212
      %s230 = sphi 0, %s230
      %s232 = sphi 0, %s230
      %s233 = sphi 0, %s232
      %s247 = sphi 0, %s233
      %s253 = sphi 0, %s255
      %s256 = sphi 0, %s253
      %s257 = sphi 0, %s256
      %s273 = sphi 0, %s257
    $region4: #{tpu_custom_call.1} parent=1 // loop_header_branch
      %26 = sbr.rel (%p24) target = $region8
    $region5: #{tpu_custom_call.1} parent=1 // loop_body
      %s28 = ssub.s32 %s23, 1
      %s29 = ssub.s32 %s23, 2
      %s30 = sadd.s32 %s23, 1
      %s31 = ssub.s32 %s23, %s30
      %p32 = scmp.eq.s32.totalorder %s31, 0
      %s34 = sadd.s32 %s33, 1
      %s35 = scalar_select %p32, %s33, %s34
      %p38 = pneg %p32
      %p39 = scmp.eq.s32.totalorder %s23, 1
      %p40 = por %p38, %p39
      %p41 = scmp.ne.s32.totalorder %s33, %s36
      %p42 = scmp.eq.s32.totalorder %s23, 0
      %p43 = por %p41, %p42
      %p44 = scmp.ne.s32.totalorder %s33, %s36
      %p45 = scmp.eq.s32.totalorder %s28, 1
      %p46 = por %p44, %p45
      %p47 = scmp.ne.s32.totalorder %s36, %s37
      %p48 = scmp.eq.s32.totalorder %s28, 0
      %p49 = por %p47, %p48
      %p50 = scmp.ne.s32.totalorder %s36, %s37
      %p51 = scmp.eq.s32.totalorder %s29, 1
      %p52 = por %p50, %p51
      %p54 = scmp.ne.s32.totalorder %s37, %s53
      %p55 = scmp.eq.s32.totalorder %s29, 0
      %p56 = por %p54, %p55
      %s57 = ssub.s32 %s23, %s30
      %p58 = scmp.eq.s32.totalorder %s57, 0
      %s60 = sadd.s32 %s59, 1
      %s61 = scalar_select %p58, %s59, %s60
      %p64 = pneg %p58
      %p65 = scmp.eq.s32.totalorder %s23, 1
      %p66 = por %p64, %p65
      %p67 = scmp.ne.s32.totalorder %s59, %s62
      %p68 = scmp.eq.s32.totalorder %s23, 0
      %p69 = por %p67, %p68
      %p70 = scmp.ne.s32.totalorder %s59, %s62
      %p71 = scmp.eq.s32.totalorder %s28, 1
      %p72 = por %p70, %p71
      %p73 = scmp.ne.s32.totalorder %s62, %s63
      %p74 = scmp.eq.s32.totalorder %s28, 0
      %p75 = por %p73, %p74
      %p76 = scmp.ne.s32.totalorder %s62, %s63
      %p77 = scmp.eq.s32.totalorder %s29, 1
      %p78 = por %p76, %p77
      %p80 = scmp.ne.s32.totalorder %s63, %s79
      %p81 = scmp.eq.s32.totalorder %s29, 0
      %p82 = por %p80, %p81
      %s84 = sadd.s32 %s83, 1
      %p87 = scmp.eq.s32.totalorder %s23, 1
      %p88 = scmp.ne.s32.totalorder %s83, %s85
      %p89 = scmp.eq.s32.totalorder %s23, 0
      %p90 = por %p88, %p89
      %p91 = scmp.ne.s32.totalorder %s83, %s85
      %p92 = scmp.eq.s32.totalorder %s28, 1
      %p93 = por %p91, %p92
      %p94 = scmp.ne.s32.totalorder %s85, %s86
      %p95 = scmp.eq.s32.totalorder %s28, 0
      %p96 = por %p94, %p95
      %p97 = scmp.ne.s32.totalorder %s85, %s86
      %p98 = scmp.eq.s32.totalorder %s29, 1
      %p99 = por %p97, %p98
      %p101 = scmp.ne.s32.totalorder %s86, %s100
      %p102 = scmp.eq.s32.totalorder %s29, 0
      %p103 = por %p101, %p102
      %s105 = sadd.s32 %s104, 1
      %p108 = scmp.eq.s32.totalorder %s23, 1
      %p109 = scmp.ne.s32.totalorder %s104, %s106
      %p110 = scmp.eq.s32.totalorder %s23, 0
      %p111 = por %p109, %p110
      %p112 = scmp.ne.s32.totalorder %s104, %s106
      %p113 = scmp.eq.s32.totalorder %s28, 1
      %p114 = por %p112, %p113
      %p115 = scmp.ne.s32.totalorder %s106, %s107
      %p116 = scmp.eq.s32.totalorder %s28, 0
      %p117 = por %p115, %p116
      %p118 = scmp.ne.s32.totalorder %s106, %s107
      %p119 = scmp.eq.s32.totalorder %s29, 1
      %p120 = por %p118, %p119
      %p122 = scmp.ne.s32.totalorder %s107, %s121
      %p123 = scmp.eq.s32.totalorder %s29, 0
      %p124 = por %p122, %p123
      %s126 = sadd.s32 %s125, 1
      %p129 = scmp.eq.s32.totalorder %s23, 1
      %p130 = scmp.ne.s32.totalorder %s125, %s127
      %p131 = scmp.eq.s32.totalorder %s23, 0
      %p132 = por %p130, %p131
      %p133 = scmp.ne.s32.totalorder %s125, %s127
      %p134 = scmp.eq.s32.totalorder %s28, 1
      %p135 = por %p133, %p134
      %p136 = scmp.ne.s32.totalorder %s127, %s128
      %p137 = scmp.eq.s32.totalorder %s28, 0
      %p138 = por %p136, %p137
      %p139 = scmp.ne.s32.totalorder %s127, %s128
      %p140 = scmp.eq.s32.totalorder %s29, 1
      %p141 = por %p139, %p140
      %p143 = scmp.ne.s32.totalorder %s128, %s142
      %p144 = scmp.eq.s32.totalorder %s29, 0
      %p145 = por %p143, %p144
      %s147 = sadd.s32 %s146, 1
      %p150 = scmp.eq.s32.totalorder %s23, 1
      %p151 = scmp.ne.s32.totalorder %s146, %s148
      %p152 = scmp.eq.s32.totalorder %s23, 0
      %p153 = por %p151, %p152
      %p154 = scmp.ne.s32.totalorder %s146, %s148
      %p155 = scmp.eq.s32.totalorder %s28, 1
      %p156 = por %p154, %p155
      %p157 = scmp.ne.s32.totalorder %s148, %s149
      %p158 = scmp.eq.s32.totalorder %s28, 0
      %p159 = por %p157, %p158
      %p160 = scmp.ne.s32.totalorder %s148, %s149
      %p161 = scmp.eq.s32.totalorder %s29, 1
      %p162 = por %p160, %p161
      %p164 = scmp.ne.s32.totalorder %s149, %s163
      %p165 = scmp.eq.s32.totalorder %s29, 0
      %p166 = por %p164, %p165
      %s168 = sadd.s32 %s167, 1
      %p171 = scmp.eq.s32.totalorder %s23, 1
      %p172 = scmp.ne.s32.totalorder %s167, %s169
      %p173 = scmp.eq.s32.totalorder %s23, 0
      %p174 = por %p172, %p173
      %p175 = scmp.ne.s32.totalorder %s167, %s169
      %p176 = scmp.eq.s32.totalorder %s28, 1
      %p177 = por %p175, %p176
      %p178 = scmp.ne.s32.totalorder %s169, %s170
      %p179 = scmp.eq.s32.totalorder %s28, 0
      %p180 = por %p178, %p179
      %p181 = scmp.ne.s32.totalorder %s169, %s170
      %p182 = scmp.eq.s32.totalorder %s29, 1
      %p183 = por %p181, %p182
      %p185 = scmp.ne.s32.totalorder %s170, %s184
      %p186 = scmp.eq.s32.totalorder %s29, 0
      %p187 = por %p185, %p186
      %s189 = sadd.s32 %s188, 1
      %p192 = scmp.eq.s32.totalorder %s23, 1
      %p193 = scmp.ne.s32.totalorder %s188, %s190
      %p194 = scmp.eq.s32.totalorder %s23, 0
      %p195 = por %p193, %p194
      %p196 = scmp.ne.s32.totalorder %s188, %s190
      %p197 = scmp.eq.s32.totalorder %s28, 1
      %p198 = por %p196, %p197
      %p199 = scmp.ne.s32.totalorder %s190, %s191
      %p200 = scmp.eq.s32.totalorder %s28, 0
      %p201 = por %p199, %p200
      %p202 = scmp.ne.s32.totalorder %s190, %s191
      %p203 = scmp.eq.s32.totalorder %s29, 1
      %p204 = por %p202, %p203
      %p206 = scmp.ne.s32.totalorder %s191, %s205
      %p207 = scmp.eq.s32.totalorder %s29, 0
      %p208 = por %p206, %p207
      %s210 = sadd.s32 %s209, 1
      %p213 = scmp.eq.s32.totalorder %s23, 1
      %p214 = scmp.ne.s32.totalorder %s209, %s211
      %p215 = scmp.eq.s32.totalorder %s23, 0
      %p216 = por %p214, %p215
      %p217 = scmp.ne.s32.totalorder %s209, %s211
      %p218 = scmp.eq.s32.totalorder %s28, 1
      %p219 = por %p217, %p218
      %p220 = scmp.ne.s32.totalorder %s211, %s212
      %p221 = scmp.eq.s32.totalorder %s28, 0
      %p222 = por %p220, %p221
      %p223 = scmp.ne.s32.totalorder %s211, %s212
      %p224 = scmp.eq.s32.totalorder %s29, 1
      %p225 = por %p223, %p224
      %p227 = scmp.ne.s32.totalorder %s212, %s226
      %p228 = scmp.eq.s32.totalorder %s29, 0
      %p229 = por %p227, %p228
      %s231 = sadd.s32 %s230, 1
      %p234 = scmp.eq.s32.totalorder %s23, 1
      %p235 = scmp.ne.s32.totalorder %s230, %s232
      %p236 = scmp.eq.s32.totalorder %s23, 0
      %p237 = por %p235, %p236
      %p238 = scmp.ne.s32.totalorder %s230, %s232
      %p239 = scmp.eq.s32.totalorder %s28, 1
      %p240 = por %p238, %p239
      %p241 = scmp.ne.s32.totalorder %s232, %s233
      %p242 = scmp.eq.s32.totalorder %s28, 0
      %p243 = por %p241, %p242
      %p244 = scmp.ne.s32.totalorder %s232, %s233
      %p245 = scmp.eq.s32.totalorder %s29, 1
      %p246 = por %p244, %p245
      %p248 = scmp.ne.s32.totalorder %s233, %s247
      %p249 = scmp.eq.s32.totalorder %s29, 0
      %p250 = por %p248, %p249
      %s251 = ssub.s32 %s23, %s30
      %p252 = scmp.eq.s32.totalorder %s251, 0
      %s254 = sadd.s32 %s253, 1
      %s255 = scalar_select %p252, %s253, %s254
      %p258 = pneg %p252
      %p259 = scmp.eq.s32.totalorder %s23, 1
      %p260 = por %p258, %p259
      %p261 = scmp.ne.s32.totalorder %s253, %s256
      %p262 = scmp.eq.s32.totalorder %s23, 0
      %p263 = por %p261, %p262
      %p264 = scmp.ne.s32.totalorder %s253, %s256
      %p265 = scmp.eq.s32.totalorder %s28, 1
      %p266 = por %p264, %p265
      %p267 = scmp.ne.s32.totalorder %s256, %s257
      %p268 = scmp.eq.s32.totalorder %s28, 0
      %p269 = por %p267, %p268
      %p270 = scmp.ne.s32.totalorder %s256, %s257
      %p271 = scmp.eq.s32.totalorder %s29, 1
      %p272 = por %p270, %p271
      %p274 = scmp.ne.s32.totalorder %s257, %s273
      %p275 = scmp.eq.s32.totalorder %s29, 0
      %p276 = por %p274, %p275
      %p277 = scmp.le.s32.totalorder 1, %s23
      %p278 = scmp.lt.s32.totalorder %s23, 3
      %p279 = pnand %p277, %p278
      %p280 = pneg %p279
      // Predicated region
      $region9: #{tpu_custom_call.1} parent=5 // pred_check
        _
      $region10: #{tpu_custom_call.1} parent=5 // pred_check_branch
        %282 = sbr.rel (%p279) target = $region12
      $region11: #{tpu_custom_call.1} parent=5 // pred_region
        %s283 = ssub.s32 %s23, 1
        // Predicated region
        $region13: #{tpu_custom_call.1} parent=11 // pred_check
          %p284 = pneg %p96
        $region14: #{tpu_custom_call.1} parent=11 // pred_check_branch
          %286 = sbr.rel (%p284) target = $region16
        $region15: #{tpu_custom_call.1} parent=11 // pred_region
          %s288 = ssub.s32 2048, 2048
          %289 = vsyncadd [#allocation6], %s288
          %s290 = sshll.u32 [#allocation5], 4
          %s291 = int_to_ptr.vmem [resolvable:$true] %s290
          %296 = dma.hbm_to_vmem [thread:$0]  %s2, 2048, %s291, [#allocation6], 256, 256, 16
        $region16: #{tpu_custom_call.1} parent=11 // pred_fallthru
          _
        // Predicated region
        $region17: #{tpu_custom_call.1} parent=11 // pred_check
          %p297 = pneg %p117
        $region18: #{tpu_custom_call.1} parent=11 // pred_check_branch
          %299 = sbr.rel (%p297) target = $region20
        $region19: #{tpu_custom_call.1} parent=11 // pred_region
          %s301 = ssub.s32 4608, 4608
          %302 = vsyncadd [#allocation6], %s301
          %s303 = sshll.u32 [#allocation7], 4
          %s304 = int_to_ptr.vmem [resolvable:$true] %s303
          %309 = dma.hbm_to_vmem [thread:$0]  %s3, 4608, %s304, [#allocation6], 256, 256, 16
        $region20: #{tpu_custom_call.1} parent=11 // pred_fallthru
          _
        // Predicated region
        $region21: #{tpu_custom_call.1} parent=11 // pred_check
          %p310 = pneg %p138
        $region22: #{tpu_custom_call.1} parent=11 // pred_check_branch
          %312 = sbr.rel (%p310) target = $region24
        $region23: #{tpu_custom_call.1} parent=11 // pred_region
          _
        $region24: #{tpu_custom_call.1} parent=11 // pred_fallthru
          _
        // Predicated region
        $region25: #{tpu_custom_call.1} parent=11 // pred_check
          %p313 = pneg %p159
        $region26: #{tpu_custom_call.1} parent=11 // pred_check_branch
          %315 = sbr.rel (%p313) target = $region28
        $region27: #{tpu_custom_call.1} parent=11 // pred_region
          _
        $region28: #{tpu_custom_call.1} parent=11 // pred_fallthru
          _
        // Predicated region
        $region29: #{tpu_custom_call.1} parent=11 // pred_check
          %p316 = pneg %p180
        $region30: #{tpu_custom_call.1} parent=11 // pred_check_branch
          %318 = sbr.rel (%p316) target = $region32
        $region31: #{tpu_custom_call.1} parent=11 // pred_region
          _
        $region32: #{tpu_custom_call.1} parent=11 // pred_fallthru
          _
        // Predicated region
        $region33: #{tpu_custom_call.1} parent=11 // pred_check
          %p319 = pneg %p201
        $region34: #{tpu_custom_call.1} parent=11 // pred_check_branch
          %321 = sbr.rel (%p319) target = $region36
        $region35: #{tpu_custom_call.1} parent=11 // pred_region
          _
        $region36: #{tpu_custom_call.1} parent=11 // pred_fallthru
          _
        // Predicated region
        $region37: #{tpu_custom_call.1} parent=11 // pred_check
          %p322 = pneg %p222
        $region38: #{tpu_custom_call.1} parent=11 // pred_check_branch
          %324 = sbr.rel (%p322) target = $region40
        $region39: #{tpu_custom_call.1} parent=11 // pred_region
          _
        $region40: #{tpu_custom_call.1} parent=11 // pred_fallthru
          _
        // Predicated region
        $region41: #{tpu_custom_call.1} parent=11 // pred_check
          %p325 = pneg %p243
        $region42: #{tpu_custom_call.1} parent=11 // pred_check_branch
          %327 = sbr.rel (%p325) target = $region44
        $region43: #{tpu_custom_call.1} parent=11 // pred_region
          _
        $region44: #{tpu_custom_call.1} parent=11 // pred_fallthru
          _
      $region12: #{tpu_custom_call.1} parent=5 // pred_fallthru
        _
      %p328 = scmp.lt.s32.totalorder %s23, 2
      // Predicated region
      $region45: #{tpu_custom_call.1} parent=5 // pred_check
        %p329 = pneg %p328
      $region46: #{tpu_custom_call.1} parent=5 // pred_check_branch
        %331 = sbr.rel (%p329) target = $region48
      $region47: #{tpu_custom_call.1} parent=5 // pred_region
        // Predicated region
        $region49: #{tpu_custom_call.1} parent=47 // pred_check
          %p332 = pneg %p43
        $region50: #{tpu_custom_call.1} parent=47 // pred_check_branch
          %334 = sbr.rel (%p332) target = $region52
        $region51: #{tpu_custom_call.1} parent=47 // pred_region
          %s335 = sand.u32 %s33, 1
          %s336 = scalar_lea.sflag [#allocation3], %s335
          %s337 = sand.u32 %s33, 1
          %s338 = smul.addr %s337, 8
          %s339 = scalar_lea.vmem [#allocation2], %s338
          %s341 = ssub.s32 128, 128
          %342 = vsyncadd %s336, %s341
          %s343 = smul.addr %s23, 128
          %s344 = scalar_lea.hbm %s0, %s343
          %s346 = sshll.u32 %s339, 4
          %s347 = int_to_ptr.vmem [resolvable:$true] %s346
          %349 = dma.hbm_to_vmem [thread:$0]  %s344, 128, %s347, %s336
        $region52: #{tpu_custom_call.1} parent=47 // pred_fallthru
          _
        // Predicated region
        $region53: #{tpu_custom_call.1} parent=47 // pred_check
          %p350 = pneg %p69
        $region54: #{tpu_custom_call.1} parent=47 // pred_check_branch
          %352 = sbr.rel (%p350) target = $region56
        $region55: #{tpu_custom_call.1} parent=47 // pred_region
          %p353 = scmp.lt.s32.totalorder %s23, 1
          %s354 = scalar_select %p353, %s23, 1
          %s355 = smul.addr %s354, 2
          %s356 = smul.addr %s355, 4
          %s357 = scalar_lea.vmem %s1, %s356
        $region56: #{tpu_custom_call.1} parent=47 // pred_fallthru
          _
      $region48: #{tpu_custom_call.1} parent=5 // pred_fallthru
        _
      %p358 = scmp.le.s32.totalorder 1, %s23
      %p359 = scmp.lt.s32.totalorder %s23, 3
      %p360 = pnand %p358, %p359
      %p361 = pneg %p360
      // Predicated region
      $region57: #{tpu_custom_call.1} parent=5 // pred_check
        _
      $region58: #{tpu_custom_call.1} parent=5 // pred_check_branch
        %363 = sbr.rel (%p360) target = $region60
      $region59: #{tpu_custom_call.1} parent=5 // pred_region
        %s364 = ssub.s32 %s23, 1
        %s365 = sand.u32 %s36, 1
        %s366 = scalar_lea.sflag [#allocation3], %s365
        %s367 = sand.u32 %s36, 1
        %s368 = smul.addr %s367, 8
        %s369 = scalar_lea.vmem [#allocation2], %s368
        // Predicated region
        $region61: #{tpu_custom_call.1} parent=59 // pred_check
          %p370 = pneg %p49
        $region62: #{tpu_custom_call.1} parent=59 // pred_check_branch
          %372 = sbr.rel (%p370) target = $region64
        $region63: #{tpu_custom_call.1} parent=59 // pred_region
          %373 = dma.done %s366, 128
        $region64: #{tpu_custom_call.1} parent=59 // pred_fallthru
          _
        // Predicated region
        $region65: #{tpu_custom_call.1} parent=59 // pred_check
          %p374 = pneg %p96
        $region66: #{tpu_custom_call.1} parent=59 // pred_check_branch
          %376 = sbr.rel (%p374) target = $region68
        $region67: #{tpu_custom_call.1} parent=59 // pred_region
          %377 = dma.done [#allocation6], 2048
        $region68: #{tpu_custom_call.1} parent=59 // pred_fallthru
          _
        // Predicated region
        $region69: #{tpu_custom_call.1} parent=59 // pred_check
          %p378 = pneg %p117
        $region70: #{tpu_custom_call.1} parent=59 // pred_check_branch
          %380 = sbr.rel (%p378) target = $region72
        $region71: #{tpu_custom_call.1} parent=59 // pred_region
          %381 = dma.done [#allocation6], 4608
        $region72: #{tpu_custom_call.1} parent=59 // pred_fallthru
          _
        %s382 = sand.u32 %s36, 1
        %s383 = scalar_lea.sflag [#allocation3], %s382
        %s384 = sand.u32 %s36, 1
        %s385 = smul.addr %s384, 8
        %s386 = scalar_lea.vmem [#allocation2], %s385
        %p387 = pneg %p49
        %p388 = pneg %p46
        %p389 = scmp.lt.s32.totalorder %s28, 1
        %s390 = scalar_select %p389, %s28, 1
        %s391 = smul.addr %s390, 2
        %s392 = smul.addr %s391, 4
        %s393 = scalar_lea.vmem %s1, %s392
        %p394 = pneg %p75
        %p395 = pneg %p72
        %p396 = pneg %p96
        %p397 = pneg %p93
        %p398 = pneg %p117
        %p399 = pneg %p114
        %p400 = pneg %p138
        %p401 = pneg %p135
        %p402 = pneg %p159
        %p403 = pneg %p156
        %p404 = pneg %p180
        %p405 = pneg %p177
        %p406 = pneg %p201
        %p407 = pneg %p198
        %p408 = pneg %p222
        %p409 = pneg %p219
        %p410 = pneg %p243
        %p411 = pneg %p240
        %p412 = pneg %p269
        %p413 = pneg %p266
        %s414 = sand.u32 %s256, 1
        %s415 = scalar_lea.sflag [#allocation4], %s414
        %s416 = sand.u32 %s256, 1
        %s417 = smul.addr %s416, 8
        %s418 = scalar_lea.vmem [#allocation8], %s417
        %p419 = scmp.lt.s32.totalorder %s28, 1
        %s420 = scalar_select %p419, %s28, 1
        %s421 = smul.addr %s420, 2
        %s422 = smul.addr %s421, 4
        %s423 = scalar_lea.vmem %s1, %s422
        %v424 = vld [vmem:[%s369] sm:$0xff]
        %v425 = vld [vmem:[#allocation5] sm:$0xff]
        %v426 = vld [vmem:[#allocation5 + $0x8] sm:$0xff]
        %v427 = vld [vmem:[#allocation5 + $0x10] sm:$0xff]
        %v428 = vld [vmem:[#allocation5 + $0x18] sm:$0xff]
        %v429 = vld [vmem:[#allocation5 + $0x20] sm:$0xff]
        %v430 = vld [vmem:[#allocation5 + $0x28] sm:$0xff]
        %v431 = vld [vmem:[#allocation5 + $0x30] sm:$0xff]
        %v432 = vld [vmem:[#allocation5 + $0x38] sm:$0xff]
        %v433 = vld [vmem:[#allocation5 + $0x40] sm:$0xff]
        %v434 = vld [vmem:[#allocation5 + $0x48] sm:$0xff]
        %v435 = vld [vmem:[#allocation5 + $0x50] sm:$0xff]
        %v436 = vld [vmem:[#allocation5 + $0x58] sm:$0xff]
        %v437 = vld [vmem:[#allocation5 + $0x60] sm:$0xff]
        %v438 = vld [vmem:[#allocation5 + $0x68] sm:$0xff]
        %v439 = vld [vmem:[#allocation5 + $0x70] sm:$0xff]
        %v440 = vld [vmem:[#allocation5 + $0x78] sm:$0xff]
        %vm441 = vcmask 523264
        %v443 = vsel %vm441, %v424, 0
        %445 = vmatprep.subr.mxu0 %v426
        %446 = vmatpush1.msra.mxu0 %v425
        %447 = vmatprep.subr.mxu0 %v428
        %448 = vmatpush1.msra.mxu0 %v427
        %449 = vmatprep.subr.mxu0 %v430
        %450 = vmatpush1.msra.mxu0 %v429
        %451 = vmatprep.subr.mxu0 %v432
        %452 = vmatpush1.msra.mxu0 %v431
        %453 = vmatprep.subr.mxu0 %v434
        %454 = vmatpush1.msra.mxu0 %v433
        %455 = vmatprep.subr.mxu0 %v436
        %456 = vmatpush1.msra.mxu0 %v435
        %457 = vmatprep.subr.mxu0 %v438
        %458 = vmatpush1.msra.mxu0 %v437
        %459 = vmatprep.subr.mxu0 %v440
        %460 = vmatpush1.msra.mxu0 %v439
        %461 = vmatprep.subr.mxu0 0.0
        %462 = vmatpush1.msra.mxu0 0.0
        %463 = vmatprep.subr.mxu0 0.0
        %464 = vmatpush1.msra.mxu0 0.0
        %465 = vmatprep.subr.mxu0 0.0
        %466 = vmatpush1.msra.mxu0 0.0
        %467 = vmatprep.subr.mxu0 0.0
        %468 = vmatpush1.msra.mxu0 0.0
        %469 = vmatprep.subr.mxu0 0.0
        %470 = vmatpush1.msra.mxu0 0.0
        %471 = vmatprep.subr.mxu0 0.0
        %472 = vmatpush1.msra.mxu0 0.0
        %473 = vmatprep.subr.mxu0 0.0
        %474 = vmatpush1.msra.mxu0 0.0
        %475 = vmatprep.subr.mxu0 0.0
        %476 = vmatpush1.msra.mxu0 0.0
        %477 = vmatprep.subr.mxu0 0.0
        %478 = vmatpush1.msra.mxu0 0.0
        %479 = vmatprep.subr.mxu0 0.0
        %480 = vmatpush1.msra.mxu0 0.0
        %481 = vmatprep.subr.mxu0 0.0
        %482 = vmatpush1.msra.mxu0 0.0
        %483 = vmatprep.subr.mxu0 0.0
        %484 = vmatpush1.msra.mxu0 0.0
        %485 = vmatprep.subr.mxu0 0.0
        %486 = vmatpush1.msra.mxu0 0.0
        %487 = vmatprep.subr.mxu0 0.0
        %488 = vmatpush1.msra.mxu0 0.0
        %489 = vmatprep.subr.mxu0 0.0
        %490 = vmatpush1.msra.mxu0 0.0
        %491 = vmatprep.subr.mxu0 0.0
        %492 = vmatpush1.msra.mxu0 0.0
        %493 = vmatprep.subr.mxu0 0.0
        %494 = vmatpush1.msra.mxu0 0.0
        %495 = vmatprep.subr.mxu0 0.0
        %496 = vmatpush1.msra.mxu0 0.0
        %497 = vmatprep.subr.mxu0 0.0
        %498 = vmatpush1.msra.mxu0 0.0
        %499 = vmatprep.subr.mxu0 0.0
        %500 = vmatpush1.msra.mxu0 0.0
        %501 = vmatprep.subr.mxu0 0.0
        %502 = vmatpush1.msra.mxu0 0.0
        %503 = vmatprep.subr.mxu0 0.0
        %504 = vmatpush1.msra.mxu0 0.0
        %505 = vmatprep.subr.mxu0 0.0
        %506 = vmatpush1.msra.mxu0 0.0
        %507 = vmatprep.subr.mxu0 0.0
        %508 = vmatpush1.msra.mxu0 0.0
        %509 = vmatprep.mubr.f32.mxu0 0.0
        %510 = vmatmul.mubr.f32.gmra.mrb[0].mxu0 %v443
        %v511 = vpop.f32.mrb[0].mxu0
        %v512 = vadd.f32 0.0, %v511
        %v513 = vpop.f32.mrb[0].mxu0
        %v514 = vadd.f32 0.0, %v513
        %515 = vdwg.mxu0
        %v516 = vlaneseq
        %v517 = vand.u32 %v516, 127
        %v518 = vadd.s32 %v517, 128
        %vm519 = vcmp.lt.s32.totalorder %v517, 0
        %v520 = vsub.s32 0, %v517
        %v521 = vsel %vm519, %v520, %v517
        %v522 = vshrl.u32 %v521, 4
        %v523 = vand.u32 %v521, 15
        %v524 = vsub.s32 0, %v523
        %v525 = vsel %vm519, %v524, %v523
        %vm526 = vcmp.lt.s32.totalorder %v518, 0
        %v527 = vsub.s32 0, %v518
        %v528 = vsel %vm526, %v527, %v518
        %v529 = vshrl.u32 %v528, 4
        %v530 = vand.u32 %v528, 15
        %v531 = vsub.s32 0, %v530
        %v532 = vsel %vm526, %v531, %v530
        %vm533 = vcmp.ne.s32.totalorder %v525, 0
        %vm534 = vcmp.ne.s32.totalorder %v532, 0
        %vm535 = vcmp.lt.s32.totalorder %v525, 0
        %vm536 = vcmp.lt.s32.totalorder %v532, 0
        %vm537 = vmand %vm535, %vm533
        %vm538 = vmand %vm536, %vm534
        %v539 = vadd.s32 %v525, 16
        %v540 = vadd.s32 %v532, 16
        %v541 = vsel %vm537, %v539, %v525
        %v542 = vsel %vm538, %v540, %v532
        %545 = vrot.lane.b32.xlu0 %v512, 127
        %v546 = vpop.permute.xlu0 %545
        %547 = vrot.lane.b32.xlu0 %v514, 127
        %v548 = vpop.permute.xlu0 %547
        %vm549 = vcmask 1039360
        %v550 = vsel %vm549, %v546, %v548
        %v553 = vsel %vm549, %v548, 0.0
        %vm554 = vcmp.lt.s32.totalorder %v541, 15
        %vm555 = vcmp.lt.s32.totalorder %v542, 15
        %v556 = vsel %vm554, %v550, 0.0
        %v557 = vsel %vm555, %v553, 0.0
        %558 = vrot.lane.b32.xlu0 %v512, 112
        %v559 = vpop.permute.xlu0 %558
        %560 = vrot.lane.b32.xlu0 %v514, 112
        %v561 = vpop.permute.xlu0 %560
        %vm562 = vcmask 916480
        %v563 = vsel %vm562, %v559, %v561
        %v566 = vsel %vm562, %v561, 0.0
        %567 = vrot.lane.b32.xlu0 %v512, 111
        %v568 = vpop.permute.xlu0 %567
        %569 = vrot.lane.b32.xlu0 %v514, 111
        %v570 = vpop.permute.xlu0 %569
        %vm571 = vcmask 908288
        %v572 = vsel %vm571, %v568, %v570
        %v575 = vsel %vm571, %v570, 0.0
        %v576 = vsel %vm554, %v572, 0.0
        %v577 = vsel %vm555, %v575, 0.0
        %v578 = vld [vmem:[%s4] sm:$0xf]
        %v579 = vld [vmem:[%s5] sm:$0xf]
        %581 = vset.pattern.permute.xlu0 0
        %582 = vperm.xlu0 %581, %v579
        %v583 = vpop.permute.xlu0 %582
        %vm585 = vcmask 261120
        %v587 = vsel %vm585, %v578, 0
        %589 = vmatprep.subr.mxu0 %v514
        %590 = vmatpush1.msra.mxu0 %v512
        %591 = vmatprep.subr.mxu0 %v557
        %592 = vmatpush1.msra.mxu0 %v556
        %593 = vmatprep.subr.mxu0 %v566
        %594 = vmatpush1.msra.mxu0 %v563
        %595 = vmatprep.subr.mxu0 %v577
        %596 = vmatpush1.msra.mxu0 %v576
        %597 = vmatprep.subr.mxu0 0.0
        %598 = vmatpush1.msra.mxu0 0.0
        %599 = vmatprep.subr.mxu0 0.0
        %600 = vmatpush1.msra.mxu0 0.0
        %601 = vmatprep.subr.mxu0 0.0
        %602 = vmatpush1.msra.mxu0 0.0
        %603 = vmatprep.subr.mxu0 0.0
        %604 = vmatpush1.msra.mxu0 0.0
        %605 = vmatprep.subr.mxu0 0.0
        %606 = vmatpush1.msra.mxu0 0.0
        %607 = vmatprep.subr.mxu0 0.0
        %608 = vmatpush1.msra.mxu0 0.0
        %609 = vmatprep.subr.mxu0 0.0
        %610 = vmatpush1.msra.mxu0 0.0
        %611 = vmatprep.subr.mxu0 0.0
        %612 = vmatpush1.msra.mxu0 0.0
        %613 = vmatprep.subr.mxu0 0.0
        %614 = vmatpush1.msra.mxu0 0.0
        %615 = vmatprep.subr.mxu0 0.0
        %616 = vmatpush1.msra.mxu0 0.0
        %617 = vmatprep.subr.mxu0 0.0
        %618 = vmatpush1.msra.mxu0 0.0
        %619 = vmatprep.subr.mxu0 0.0
        %620 = vmatpush1.msra.mxu0 0.0
        %621 = vmatprep.subr.mxu0 0.0
        %622 = vmatpush1.msra.mxu0 0.0
        %623 = vmatprep.subr.mxu0 0.0
        %624 = vmatpush1.msra.mxu0 0.0
        %625 = vmatprep.subr.mxu0 0.0
        %626 = vmatpush1.msra.mxu0 0.0
        %627 = vmatprep.subr.mxu0 0.0
        %628 = vmatpush1.msra.mxu0 0.0
        %629 = vmatprep.subr.mxu0 0.0
        %630 = vmatpush1.msra.mxu0 0.0
        %631 = vmatprep.subr.mxu0 0.0
        %632 = vmatpush1.msra.mxu0 0.0
        %633 = vmatprep.subr.mxu0 0.0
        %634 = vmatpush1.msra.mxu0 0.0
        %635 = vmatprep.subr.mxu0 0.0
        %636 = vmatpush1.msra.mxu0 0.0
        %637 = vmatprep.subr.mxu0 0.0
        %638 = vmatpush1.msra.mxu0 0.0
        %639 = vmatprep.subr.mxu0 0.0
        %640 = vmatpush1.msra.mxu0 0.0
        %641 = vmatprep.subr.mxu0 0.0
        %642 = vmatpush1.msra.mxu0 0.0
        %643 = vmatprep.subr.mxu0 0.0
        %644 = vmatpush1.msra.mxu0 0.0
        %645 = vmatprep.subr.mxu0 0.0
        %646 = vmatpush1.msra.mxu0 0.0
        %647 = vmatprep.subr.mxu0 0.0
        %648 = vmatpush1.msra.mxu0 0.0
        %649 = vmatprep.subr.mxu0 0.0
        %650 = vmatpush1.msra.mxu0 0.0
        %651 = vmatprep.subr.mxu0 0.0
        %652 = vmatpush1.msra.mxu0 0.0
        %653 = vmatprep.mubr.f32.mxu0 0.0
        %654 = vmatmul.mubr.f32.gmra.mrb[0].mxu0 %v587
        %v655 = vpop.f32.mrb[0].mxu0
        %v656 = vadd.f32 %v583, %v655
        %v657 = vpop.f32.mrb[0].mxu0
        %v658 = vadd.f32 %v583, %v657
        %659 = vdwg.mxu0
        %v660 = vld [vmem:[%s423] sm:$0xff]
        %v661 = vld [vmem:[#allocation7] sm:$0xff]
        %v662 = vld [vmem:[#allocation7 + $0x8] sm:$0xff]
        %v663 = vld [vmem:[#allocation7 + $0x10] sm:$0xff]
        %v664 = vld [vmem:[#allocation7 + $0x18] sm:$0xff]
        %v665 = vld [vmem:[#allocation7 + $0x20] sm:$0xff]
        %v666 = vld [vmem:[#allocation7 + $0x28] sm:$0xff]
        %v667 = vld [vmem:[#allocation7 + $0x30] sm:$0xff]
        %v668 = vld [vmem:[#allocation7 + $0x38] sm:$0xff]
        %v669 = vld [vmem:[#allocation7 + $0x40] sm:$0xff]
        %v670 = vld [vmem:[#allocation7 + $0x48] sm:$0xff]
        %v671 = vld [vmem:[#allocation7 + $0x50] sm:$0xff]
        %v672 = vld [vmem:[#allocation7 + $0x58] sm:$0xff]
        %v673 = vld [vmem:[#allocation7 + $0x60] sm:$0xff]
        %v674 = vld [vmem:[#allocation7 + $0x68] sm:$0xff]
        %v675 = vld [vmem:[#allocation7 + $0x70] sm:$0xff]
        %v676 = vld [vmem:[#allocation7 + $0x78] sm:$0xff]
        %v677 = vld [vmem:[#allocation7 + $0x80] sm:$0xff]
        %v678 = vld [vmem:[#allocation7 + $0x88] sm:$0xff]
        %v679 = vld [vmem:[#allocation7 + $0x90] sm:$0xff]
        %v680 = vld [vmem:[#allocation7 + $0x98] sm:$0xff]
        %v681 = vld [vmem:[#allocation7 + $0xa0] sm:$0xff]
        %v682 = vld [vmem:[#allocation7 + $0xa8] sm:$0xff]
        %v683 = vld [vmem:[#allocation7 + $0xb0] sm:$0xff]
        %v684 = vld [vmem:[#allocation7 + $0xb8] sm:$0xff]
        %v685 = vld [vmem:[#allocation7 + $0xc0] sm:$0xff]
        %v686 = vld [vmem:[#allocation7 + $0xc8] sm:$0xff]
        %v687 = vld [vmem:[#allocation7 + $0xd0] sm:$0xff]
        %v688 = vld [vmem:[#allocation7 + $0xd8] sm:$0xff]
        %v689 = vld [vmem:[#allocation7 + $0xe0] sm:$0xff]
        %v690 = vld [vmem:[#allocation7 + $0xe8] sm:$0xff]
        %v691 = vld [vmem:[#allocation7 + $0xf0] sm:$0xff]
        %v692 = vld [vmem:[#allocation7 + $0xf8] sm:$0xff]
        %v693 = vld [vmem:[#allocation7 + $0x100] sm:$0xff]
        %v694 = vld [vmem:[#allocation7 + $0x108] sm:$0xff]
        %v695 = vld [vmem:[#allocation7 + $0x110] sm:$0xff]
        %v696 = vld [vmem:[#allocation7 + $0x118] sm:$0xff]
        %v698 = vcombine.high %v660, %v660
        %vm699 = vcmask 130048
        %v700 = vsel %vm699, %v698, 0
        %702 = vmatprep.subr.mxu0 %v662
        %703 = vmatpush1.msra.mxu0 %v661
        %704 = vmatprep.subr.mxu0 %v664
        %705 = vmatpush1.msra.mxu0 %v663
        %706 = vmatprep.subr.mxu0 %v666
        %707 = vmatpush1.msra.mxu0 %v665
        %708 = vmatprep.subr.mxu0 %v668
        %709 = vmatpush1.msra.mxu0 %v667
        %710 = vmatprep.subr.mxu0 %v670
        %711 = vmatpush1.msra.mxu0 %v669
        %712 = vmatprep.subr.mxu0 %v672
        %713 = vmatpush1.msra.mxu0 %v671
        %714 = vmatprep.subr.mxu0 %v674
        %715 = vmatpush1.msra.mxu0 %v673
        %716 = vmatprep.subr.mxu0 %v676
        %717 = vmatpush1.msra.mxu0 %v675
        %718 = vmatprep.subr.mxu0 %v678
        %719 = vmatpush1.msra.mxu0 %v677
        %720 = vmatprep.subr.mxu0 %v680
        %721 = vmatpush1.msra.mxu0 %v679
        %722 = vmatprep.subr.mxu0 %v682
        %723 = vmatpush1.msra.mxu0 %v681
        %724 = vmatprep.subr.mxu0 %v684
        %725 = vmatpush1.msra.mxu0 %v683
        %726 = vmatprep.subr.mxu0 %v686
        %727 = vmatpush1.msra.mxu0 %v685
        %728 = vmatprep.subr.mxu0 %v688
        %729 = vmatpush1.msra.mxu0 %v687
        %730 = vmatprep.subr.mxu0 %v690
        %731 = vmatpush1.msra.mxu0 %v689
        %732 = vmatprep.subr.mxu0 %v692
        %733 = vmatpush1.msra.mxu0 %v691
        %734 = vmatprep.subr.mxu0 %v694
        %735 = vmatpush1.msra.mxu0 %v693
        %736 = vmatprep.subr.mxu0 %v696
        %737 = vmatpush1.msra.mxu0 %v695
        %738 = vmatprep.subr.mxu0 0.0
        %739 = vmatpush1.msra.mxu0 0.0
        %740 = vmatprep.subr.mxu0 0.0
        %741 = vmatpush1.msra.mxu0 0.0
        %742 = vmatprep.subr.mxu0 0.0
        %743 = vmatpush1.msra.mxu0 0.0
        %744 = vmatprep.subr.mxu0 0.0
        %745 = vmatpush1.msra.mxu0 0.0
        %746 = vmatprep.subr.mxu0 0.0
        %747 = vmatpush1.msra.mxu0 0.0
        %748 = vmatprep.subr.mxu0 0.0
        %749 = vmatpush1.msra.mxu0 0.0
        %750 = vmatprep.subr.mxu0 0.0
        %751 = vmatpush1.msra.mxu0 0.0
        %752 = vmatprep.subr.mxu0 0.0
        %753 = vmatpush1.msra.mxu0 0.0
        %754 = vmatprep.subr.mxu0 0.0
        %755 = vmatpush1.msra.mxu0 0.0
        %756 = vmatprep.subr.mxu0 0.0
        %757 = vmatpush1.msra.mxu0 0.0
        %758 = vmatprep.subr.mxu0 0.0
        %759 = vmatpush1.msra.mxu0 0.0
        %760 = vmatprep.subr.mxu0 0.0
        %761 = vmatpush1.msra.mxu0 0.0
        %762 = vmatprep.subr.mxu0 0.0
        %763 = vmatpush1.msra.mxu0 0.0
        %764 = vmatprep.subr.mxu0 0.0
        %765 = vmatpush1.msra.mxu0 0.0
        %766 = vmatprep.mubr.f32.mxu0 %v700
        %767 = vmatmul.mubr.f32.gmra.mrb[0].mxu0 %v660
        %v768 = vpop.f32.mrb[0].mxu0
        %v769 = vadd.f32 0.0, %v768
        %v770 = vpop.f32.mrb[0].mxu0
        %v771 = vadd.f32 0.0, %v770
        %772 = vdwg.mxu0
        %v775 = vrot.slane %v656, 4
        %v776 = vrot.slane %v658, 4
        %vm779 = vcmask 1043456
        %v780 = vsel %vm779, %v769, %v775
        %v781 = vsel %vm779, %v771, %v776
        %784 = vrot.lane.b32.xlu0 %v780, 127
        %v785 = vpop.permute.xlu0 %784
        %786 = vrot.lane.b32.xlu0 %v781, 127
        %v787 = vpop.permute.xlu0 %786
        %v788 = vsel %vm549, %v785, %v787
        %v791 = vsel %vm549, %v787, 0.0
        %v792 = vsel %vm554, %v788, 0.0
        %v793 = vsel %vm555, %v791, 0.0
        %794 = vrot.lane.b32.xlu0 %v780, 126
        %v795 = vpop.permute.xlu0 %794
        %796 = vrot.lane.b32.xlu0 %v781, 126
        %v797 = vpop.permute.xlu0 %796
        %vm798 = vcmask 1031168
        %v799 = vsel %vm798, %v795, %v797
        %v802 = vsel %vm798, %v797, 0.0
        %vm803 = vcmp.lt.s32.totalorder %v541, 14
        %vm804 = vcmp.lt.s32.totalorder %v542, 14
        %v805 = vsel %vm803, %v799, 0.0
        %v806 = vsel %vm804, %v802, 0.0
        %807 = vrot.lane.b32.xlu0 %v780, 112
        %v808 = vpop.permute.xlu0 %807
        %809 = vrot.lane.b32.xlu0 %v781, 112
        %v810 = vpop.permute.xlu0 %809
        %v811 = vsel %vm562, %v808, %v810
        %v814 = vsel %vm562, %v810, 0.0
        %815 = vrot.lane.b32.xlu0 %v780, 111
        %v816 = vpop.permute.xlu0 %815
        %817 = vrot.lane.b32.xlu0 %v781, 111
        %v818 = vpop.permute.xlu0 %817
        %v819 = vsel %vm571, %v816, %v818
        %v822 = vsel %vm571, %v818, 0.0
        %v823 = vsel %vm554, %v819, 0.0
        %v824 = vsel %vm555, %v822, 0.0
        %825 = vrot.lane.b32.xlu0 %v780, 110
        %v826 = vpop.permute.xlu0 %825
        %827 = vrot.lane.b32.xlu0 %v781, 110
        %v828 = vpop.permute.xlu0 %827
        %vm829 = vcmask 900096
        %v830 = vsel %vm829, %v826, %v828
        %v833 = vsel %vm829, %v828, 0.0
        %v834 = vsel %vm803, %v830, 0.0
        %v835 = vsel %vm804, %v833, 0.0
        %836 = vrot.lane.b32.xlu0 %v780, 96
        %v837 = vpop.permute.xlu0 %836
        %838 = vrot.lane.b32.xlu0 %v781, 96
        %v839 = vpop.permute.xlu0 %838
        %vm840 = vcmask 785408
        %v841 = vsel %vm840, %v837, %v839
        %v844 = vsel %vm840, %v839, 0.0
        %845 = vrot.lane.b32.xlu0 %v780, 95
        %v846 = vpop.permute.xlu0 %845
        %847 = vrot.lane.b32.xlu0 %v781, 95
        %v848 = vpop.permute.xlu0 %847
        %vm849 = vcmask 777216
        %v850 = vsel %vm849, %v846, %v848
        %v853 = vsel %vm849, %v848, 0.0
        %v854 = vsel %vm554, %v850, 0.0
        %v855 = vsel %vm555, %v853, 0.0
        %856 = vrot.lane.b32.xlu0 %v780, 94
        %v857 = vpop.permute.xlu0 %856
        %858 = vrot.lane.b32.xlu0 %v781, 94
        %v859 = vpop.permute.xlu0 %858
        %vm860 = vcmask 769024
        %v861 = vsel %vm860, %v857, %v859
        %v864 = vsel %vm860, %v859, 0.0
        %v865 = vsel %vm803, %v861, 0.0
        %v866 = vsel %vm804, %v864, 0.0
        %v867 = vld [vmem:[%s6] sm:$0xf]
        %v868 = vld [vmem:[%s7] sm:$0xf]
        %870 = vset.pattern.permute.xlu0 0
        %871 = vperm.xlu0 %870, %v868
        %v872 = vpop.permute.xlu0 %871
        %vm874 = vcmask 588800
        %v876 = vsel %vm874, %v867, 0
        %878 = vmatprep.subr.mxu0 %v781
        %879 = vmatpush1.msra.mxu0 %v780
        %880 = vmatprep.subr.mxu0 %v793
        %881 = vmatpush1.msra.mxu0 %v792
        %882 = vmatprep.subr.mxu0 %v806
        %883 = vmatpush1.msra.mxu0 %v805
        %884 = vmatprep.subr.mxu0 %v814
        %885 = vmatpush1.msra.mxu0 %v811
        %886 = vmatprep.subr.mxu0 %v824
        %887 = vmatpush1.msra.mxu0 %v823
        %888 = vmatprep.subr.mxu0 %v835
        %889 = vmatpush1.msra.mxu0 %v834
        %890 = vmatprep.subr.mxu0 %v844
        %891 = vmatpush1.msra.mxu0 %v841
        %892 = vmatprep.subr.mxu0 %v855
        %893 = vmatpush1.msra.mxu0 %v854
        %894 = vmatprep.subr.mxu0 %v866
        %895 = vmatpush1.msra.mxu0 %v865
        %896 = vmatprep.subr.mxu0 0.0
        %897 = vmatpush1.msra.mxu0 0.0
        %898 = vmatprep.subr.mxu0 0.0
        %899 = vmatpush1.msra.mxu0 0.0
        %900 = vmatprep.subr.mxu0 0.0
        %901 = vmatpush1.msra.mxu0 0.0
        %902 = vmatprep.subr.mxu0 0.0
        %903 = vmatpush1.msra.mxu0 0.0
        %904 = vmatprep.subr.mxu0 0.0
        %905 = vmatpush1.msra.mxu0 0.0
        %906 = vmatprep.subr.mxu0 0.0
        %907 = vmatpush1.msra.mxu0 0.0
        %908 = vmatprep.subr.mxu0 0.0
        %909 = vmatpush1.msra.mxu0 0.0
        %910 = vmatprep.subr.mxu0 0.0
        %911 = vmatpush1.msra.mxu0 0.0
        %912 = vmatprep.subr.mxu0 0.0
        %913 = vmatpush1.msra.mxu0 0.0
        %914 = vmatprep.subr.mxu0 0.0
        %915 = vmatpush1.msra.mxu0 0.0
        %916 = vmatprep.subr.mxu0 0.0
        %917 = vmatpush1.msra.mxu0 0.0
        %918 = vmatprep.subr.mxu0 0.0
        %919 = vmatpush1.msra.mxu0 0.0
        %920 = vmatprep.subr.mxu0 0.0
        %921 = vmatpush1.msra.mxu0 0.0
        %922 = vmatprep.subr.mxu0 0.0
        %923 = vmatpush1.msra.mxu0 0.0
        %924 = vmatprep.subr.mxu0 0.0
        %925 = vmatpush1.msra.mxu0 0.0
        %926 = vmatprep.subr.mxu0 0.0
        %927 = vmatpush1.msra.mxu0 0.0
        %928 = vmatprep.subr.mxu0 0.0
        %929 = vmatpush1.msra.mxu0 0.0
        %930 = vmatprep.subr.mxu0 0.0
        %931 = vmatpush1.msra.mxu0 0.0
        %932 = vmatprep.subr.mxu0 0.0
        %933 = vmatpush1.msra.mxu0 0.0
        %934 = vmatprep.subr.mxu0 0.0
        %935 = vmatpush1.msra.mxu0 0.0
        %936 = vmatprep.subr.mxu0 0.0
        %937 = vmatpush1.msra.mxu0 0.0
        %938 = vmatprep.subr.mxu0 0.0
        %939 = vmatpush1.msra.mxu0 0.0
        %940 = vmatprep.subr.mxu0 0.0
        %941 = vmatpush1.msra.mxu0 0.0
        %942 = vmatprep.mubr.f32.mxu0 0.0
        %943 = vmatmul.mubr.f32.gmra.mrb[0].mxu0 %v876
        %v944 = vpop.f32.mrb[0].mxu0
        %v945 = vadd.f32 %v872, %v944
        %v946 = vpop.f32.mrb[0].mxu0
        %v947 = vadd.f32 %v872, %v946
        %948 = vdwg.mxu0
        %v949 = vmax.f32 %v945, 0.0
        %v950 = vmax.f32 %v947, 0.0
        %953 = vrot.lane.b32.xlu0 %v949, 127
        %v954 = vpop.permute.xlu0 %953
        %955 = vrot.lane.b32.xlu0 %v950, 127
        %v956 = vpop.permute.xlu0 %955
        %v957 = vsel %vm549, %v954, %v956
        %v960 = vsel %vm549, %v956, 0.0
        %v961 = vsel %vm554, %v957, 0.0
        %v962 = vsel %vm555, %v960, 0.0
        %963 = vrot.lane.b32.xlu0 %v949, 126
        %v964 = vpop.permute.xlu0 %963
        %965 = vrot.lane.b32.xlu0 %v950, 126
        %v966 = vpop.permute.xlu0 %965
        %v967 = vsel %vm798, %v964, %v966
        %v970 = vsel %vm798, %v966, 0.0
        %v971 = vsel %vm803, %v967, 0.0
        %v972 = vsel %vm804, %v970, 0.0
        %973 = vrot.lane.b32.xlu0 %v949, 112
        %v974 = vpop.permute.xlu0 %973
        %975 = vrot.lane.b32.xlu0 %v950, 112
        %v976 = vpop.permute.xlu0 %975
        %v977 = vsel %vm562, %v974, %v976
        %v979 = vsel %vm562, %v976, 0.0
        %980 = vrot.lane.b32.xlu0 %v949, 111
        %v981 = vpop.permute.xlu0 %980
        %982 = vrot.lane.b32.xlu0 %v950, 111
        %v983 = vpop.permute.xlu0 %982
        %v984 = vsel %vm571, %v981, %v983
        %v987 = vsel %vm571, %v983, 0.0
        %v988 = vsel %vm554, %v984, 0.0
        %v989 = vsel %vm555, %v987, 0.0
        %990 = vrot.lane.b32.xlu0 %v949, 110
        %v991 = vpop.permute.xlu0 %990
        %992 = vrot.lane.b32.xlu0 %v950, 110
        %v993 = vpop.permute.xlu0 %992
        %v994 = vsel %vm829, %v991, %v993
        %v997 = vsel %vm829, %v993, 0.0
        %v998 = vsel %vm803, %v994, 0.0
        %v999 = vsel %vm804, %v997, 0.0
        %1000 = vrot.lane.b32.xlu0 %v949, 96
        %v1001 = vpop.permute.xlu0 %1000
        %1002 = vrot.lane.b32.xlu0 %v950, 96
        %v1003 = vpop.permute.xlu0 %1002
        %v1004 = vsel %vm840, %v1001, %v1003
        %v1007 = vsel %vm840, %v1003, 0.0
        %1008 = vrot.lane.b32.xlu0 %v949, 95
        %v1009 = vpop.permute.xlu0 %1008
        %1010 = vrot.lane.b32.xlu0 %v950, 95
        %v1011 = vpop.permute.xlu0 %1010
        %v1012 = vsel %vm849, %v1009, %v1011
        %v1015 = vsel %vm849, %v1011, 0.0
        %v1016 = vsel %vm554, %v1012, 0.0
        %v1017 = vsel %vm555, %v1015, 0.0
        %1018 = vrot.lane.b32.xlu0 %v949, 94
        %v1019 = vpop.permute.xlu0 %1018
        %1020 = vrot.lane.b32.xlu0 %v950, 94
        %v1021 = vpop.permute.xlu0 %1020
        %v1022 = vsel %vm860, %v1019, %v1021
        %v1025 = vsel %vm860, %v1021, 0.0
        %v1026 = vsel %vm803, %v1022, 0.0
        %v1027 = vsel %vm804, %v1025, 0.0
        %v1030 = vrot.slane %v961, 4
        %v1031 = vrot.slane %v962, 4
        %v1035 = vrot.slane %v977, 4
        %v1036 = vrot.slane %v979, 4
        %v1041 = vrot.slane %v998, 4
        %v1042 = vrot.slane %v999, 4
        %v1047 = vrot.slane %v1016, 4
        %v1048 = vrot.slane %v1017, 4
        %v1051 = vsel %vm779, %v949, %v1030
        %v1052 = vsel %vm779, %v950, %v1031
        %v1053 = vsel %vm779, %v971, %v1035
        %v1054 = vsel %vm779, %v972, %v1036
        %v1055 = vsel %vm779, %v988, %v1041
        %v1056 = vsel %vm779, %v989, %v1042
        %v1057 = vsel %vm779, %v1004, %v1047
        %v1058 = vsel %vm779, %v1007, %v1048
        %v1059 = vld [vmem:[%s8] sm:$0xf]
        %v1060 = vld [vmem:[%s9] sm:$0xf]
        %1062 = vset.pattern.permute.xlu0 0
        %1063 = vperm.xlu0 %1062, %v1060
        %v1064 = vpop.permute.xlu0 %1063
        %vm1066 = vcmask 293888
        %v1068 = vsel %vm1066, %v1059, 0
        %v1071 = vsel %vm779, %v1026, 0
        %v1074 = vsel %vm779, %v1027, 0
        %1076 = vmatprep.subr.mxu0 %v1052
        %1077 = vmatpush1.msra.mxu0 %v1051
        %1078 = vmatprep.subr.mxu0 %v1054
        %1079 = vmatpush1.msra.mxu0 %v1053
        %1080 = vmatprep.subr.mxu0 %v1056
        %1081 = vmatpush1.msra.mxu0 %v1055
        %1082 = vmatprep.subr.mxu0 %v1058
        %1083 = vmatpush1.msra.mxu0 %v1057
        %1084 = vmatprep.subr.mxu0 %v1074
        %1085 = vmatpush1.msra.mxu0 %v1071
        %1086 = vmatprep.subr.mxu0 0.0
        %1087 = vmatpush1.msra.mxu0 0.0
        %1088 = vmatprep.subr.mxu0 0.0
        %1089 = vmatpush1.msra.mxu0 0.0
        %1090 = vmatprep.subr.mxu0 0.0
        %1091 = vmatpush1.msra.mxu0 0.0
        %1092 = vmatprep.subr.mxu0 0.0
        %1093 = vmatpush1.msra.mxu0 0.0
        %1094 = vmatprep.subr.mxu0 0.0
        %1095 = vmatpush1.msra.mxu0 0.0
        %1096 = vmatprep.subr.mxu0 0.0
        %1097 = vmatpush1.msra.mxu0 0.0
        %1098 = vmatprep.subr.mxu0 0.0
        %1099 = vmatpush1.msra.mxu0 0.0
        %1100 = vmatprep.subr.mxu0 0.0
        %1101 = vmatpush1.msra.mxu0 0.0
        %1102 = vmatprep.subr.mxu0 0.0
        %1103 = vmatpush1.msra.mxu0 0.0
        %1104 = vmatprep.subr.mxu0 0.0
        %1105 = vmatpush1.msra.mxu0 0.0
        %1106 = vmatprep.subr.mxu0 0.0
        %1107 = vmatpush1.msra.mxu0 0.0
        %1108 = vmatprep.subr.mxu0 0.0
        %1109 = vmatpush1.msra.mxu0 0.0
        %1110 = vmatprep.subr.mxu0 0.0
        %1111 = vmatpush1.msra.mxu0 0.0
        %1112 = vmatprep.subr.mxu0 0.0
        %1113 = vmatpush1.msra.mxu0 0.0
        %1114 = vmatprep.subr.mxu0 0.0
        %1115 = vmatpush1.msra.mxu0 0.0
        %1116 = vmatprep.subr.mxu0 0.0
        %1117 = vmatpush1.msra.mxu0 0.0
        %1118 = vmatprep.subr.mxu0 0.0
        %1119 = vmatpush1.msra.mxu0 0.0
        %1120 = vmatprep.subr.mxu0 0.0
        %1121 = vmatpush1.msra.mxu0 0.0
        %1122 = vmatprep.subr.mxu0 0.0
        %1123 = vmatpush1.msra.mxu0 0.0
        %1124 = vmatprep.subr.mxu0 0.0
        %1125 = vmatpush1.msra.mxu0 0.0
        %1126 = vmatprep.subr.mxu0 0.0
        %1127 = vmatpush1.msra.mxu0 0.0
        %1128 = vmatprep.subr.mxu0 0.0
        %1129 = vmatpush1.msra.mxu0 0.0
        %1130 = vmatprep.subr.mxu0 0.0
        %1131 = vmatpush1.msra.mxu0 0.0
        %1132 = vmatprep.subr.mxu0 0.0
        %1133 = vmatpush1.msra.mxu0 0.0
        %1134 = vmatprep.subr.mxu0 0.0
        %1135 = vmatpush1.msra.mxu0 0.0
        %1136 = vmatprep.subr.mxu0 0.0
        %1137 = vmatpush1.msra.mxu0 0.0
        %1138 = vmatprep.subr.mxu0 0.0
        %1139 = vmatpush1.msra.mxu0 0.0
        %1140 = vmatprep.mubr.f32.mxu0 0.0
        %1141 = vmatmul.mubr.f32.gmra.mrb[0].mxu0 %v1068
        %v1142 = vpop.f32.mrb[0].mxu0
        %v1143 = vadd.f32 %v1064, %v1142
        %v1144 = vpop.f32.mrb[0].mxu0
        %v1145 = vadd.f32 %v1064, %v1144
        %1146 = vdwg.mxu0
        %v1147 = vmax.f32 %v1143, 0.0
        %v1148 = vmax.f32 %v1145, 0.0
        %v1151 = vcombine.low %v1147, %v1148
        %1153 = vst [vmem:[%s418] sm:$0xff] %v1151
        %s1154 = sand.u32 %s256, 1
        %s1155 = scalar_lea.sflag [#allocation4], %s1154
        %s1156 = sand.u32 %s256, 1
        %s1157 = smul.addr %s1156, 8
        %s1158 = scalar_lea.vmem [#allocation8], %s1157
        // Predicated region
        $region73: #{tpu_custom_call.1} parent=59 // pred_check
          %p1159 = pneg %p266
        $region74: #{tpu_custom_call.1} parent=59 // pred_check_branch
          %1161 = sbr.rel (%p1159) target = $region76
        $region75: #{tpu_custom_call.1} parent=59 // pred_region
          %s1163 = ssub.s32 128, 128
          %1164 = vsyncadd %s1155, %s1163
          %s1165 = smul.addr %s28, 2
          %s1166 = smul.addr %s1165, 64
          %s1167 = scalar_lea.hbm %s10, %s1166
          %s1169 = sshll.u32 %s1158, 4
          %s1170 = int_to_ptr.vmem [resolvable:$true] %s1169
          %1172 = dma.vmem_to_hbm [thread:$0]  %s1170, 128, %s1167, %s1155
        $region76: #{tpu_custom_call.1} parent=59 // pred_fallthru
          _
      $region60: #{tpu_custom_call.1} parent=5 // pred_fallthru
        _
      %p1173 = scmp.le.s32.totalorder 2, %s23
      // Predicated region
      $region77: #{tpu_custom_call.1} parent=5 // pred_check
        %p1174 = pneg %p1173
      $region78: #{tpu_custom_call.1} parent=5 // pred_check_branch
        %1176 = sbr.rel (%p1174) target = $region80
      $region79: #{tpu_custom_call.1} parent=5 // pred_region
        %s1177 = ssub.s32 %s23, 2
        // Predicated region
        $region81: #{tpu_custom_call.1} parent=79 // pred_check
          %p1178 = pneg %p272
        $region82: #{tpu_custom_call.1} parent=79 // pred_check_branch
          %1180 = sbr.rel (%p1178) target = $region84
        $region83: #{tpu_custom_call.1} parent=79 // pred_region
          %s1181 = sand.u32 %s257, 1
          %s1182 = scalar_lea.sflag [#allocation4], %s1181
          %s1183 = sand.u32 %s257, 1
          %s1184 = smul.addr %s1183, 8
          %s1185 = scalar_lea.vmem [#allocation8], %s1184
          %1186 = dma.done %s1182, 128
        $region84: #{tpu_custom_call.1} parent=79 // pred_fallthru
          _
      $region80: #{tpu_custom_call.1} parent=5 // pred_fallthru
        _
    $region6: #{tpu_custom_call.1} parent=1 // loop_footer
      %s27 = sadd.s32 1, %s23
    $region7: #{tpu_custom_call.1} parent=1 // loop_footer_branch
      %22 = sbr.rel target = $region3
    $region8: #{tpu_custom_call.1} parent=1 // loop_exit
      _
    %1187 = vsyncpa [#allocation3], 1
    %s1188 = scalar_lea.sflag [#allocation3], 1
    %1189 = vsyncpa %s1188, 1
    %1190 = vsyncpa [#allocation6], 1
    %1191 = vsyncpa [#allocation4], 1
    %s1192 = scalar_lea.sflag [#allocation4], 1
    %1193 = vsyncpa %s1192, 1

</llo_original>
